<compile_context>
chip_gen: v7x
topology: tpu7x:2x2x1
jax: 0.10.0
libtpu: 0.0.40
codegen_flags: <defaults>
</compile_context>

<pallas_src>
import jax
import jax.numpy as jnp
from jax.experimental import pallas as pl
from jax.experimental.pallas import tpu as pltpu


def _round_up(x, n):
    return ((x + n - 1) // n) * n


def _pick_tile(dim, target):
    """Largest multiple of 128 that divides `dim` and is <= `target`.

    Falls back to the full extent when `dim` is not a multiple of 128
    (a full-extent block always satisfies the (8,128) tiling rule)."""
    if dim % 128 != 0:
        return dim
    t = min(target, dim)
    t = (t // 128) * 128
    while dim % t != 0:
        t -= 128
    return t


def _lora_linear_kernel(x_ref, wt_ref, bias_ref, at_ref, bt_ref, o_ref,
                        acc_ref, xa_ref):
    # x_ref:    (tm, tk)       activation tile (native dtype)
    # wt_ref:   (tk, tn)       W^T tile (native dtype)
    # bias_ref: (1, tn)
    # at_ref:   (tk, rank)     A^T tile
    # bt_ref:   (rank, tn)     B^T tile, pre-scaled by alpha/rank
    # acc_ref:  (tm, tn) f32   base-matmul accumulator (lives across K)
    # xa_ref:   (tm, rank) f32 x @ A^T accumulator (lives across N and K)
    j = pl.program_id(1)
    k = pl.program_id(2)
    nk = pl.num_programs(2)

    @pl.when(k == 0)
    def _():
        acc_ref[...] = jnp.zeros_like(acc_ref)

    @pl.when(jnp.logical_and(j == 0, k == 0))
    def _():
        xa_ref[...] = jnp.zeros_like(xa_ref)

    x = x_ref[...]

    # Frozen base linear: native-dtype tiles straight into the MXU, f32 acc.
    acc_ref[...] += jnp.dot(x, wt_ref[...], preferred_element_type=jnp.float32)

    # LoRA rank projection: computed once per row tile (only while j == 0),
    # accumulated over the K axis, then reused for the remaining N tiles.
    @pl.when(j == 0)
    def _():
        xa_ref[...] += jnp.dot(x, at_ref[...],
                               preferred_element_type=jnp.float32)

    @pl.when(k == nk - 1)
    def _():
        lora = jnp.dot(xa_ref[...], bt_ref[...].astype(jnp.float32),
                       preferred_element_type=jnp.float32)
        out = acc_ref[...] + bias_ref[...].astype(jnp.float32) + lora
        o_ref[...] = out.astype(o_ref.dtype)


def prepare_fixed_lora_linear_params(w, bias, lora_a, lora_b, lora_alpha):
    """One-time weight prep (hoisted out of the per-forward hot path).

    w:      [out_features, in_features]   (torch Linear weight layout)
    bias:   [out_features] or None
    lora_a: [rank, in_features]
    lora_b: [out_features, rank]
    """
    out_features, in_features = w.shape
    rank = lora_a.shape[0]
    scale = lora_alpha / rank
    wt = jnp.transpose(w)                                                 # (in, out)
    at = jnp.transpose(lora_a)                                            # (in, rank)
    bt_scaled = jnp.transpose(lora_b) * jnp.asarray(scale, lora_b.dtype)  # (rank, out)
    if bias is None:
        bias2d = jnp.zeros((1, out_features), w.dtype)
    else:
        bias2d = bias.reshape(1, out_features)
    return wt, bias2d, at, bt_scaled


def fixed_lora_linear_apply(feature, wt, bias2d, at, bt_scaled, *,
                            block_rows=None, block_n=256, block_k=512):
    """Apply Fixed_Lora_Linear with pre-prepared (transposed / pre-scaled) params."""
    in_features, out_features = wt.shape
    rank = at.shape[1]

    lead_shape = feature.shape[:-1]
    x2d = feature.reshape(-1, in_features)
    m = x2d.shape[0]

    # Row tile: keep >= 2 tiles on the parallel M axis when possible so that
    # v7x's two TensorCores both get work; multiple of 8 sublanes.
    if block_rows is not None:
        tm = block_rows
    else:
        tm = min(256, _round_up(max(8, -(-m // 2)), 8))
    m_padded = _round_up(m, tm)
    if m_padded != m:
        x2d = jnp.pad(x2d, ((0, m_padded - m), (0, 0)))

    tn = _pick_tile(out_features, block_n)
    tk = _pick_tile(in_features, block_k)

    grid = (m_padded // tm, out_features // tn, in_features // tk)

    out2d = pl.pallas_call(
        _lora_linear_kernel,
        out_shape=jax.ShapeDtypeStruct((m_padded, out_features), feature.dtype),
        grid_spec=pltpu.PrefetchScalarGridSpec(
            num_scalar_prefetch=0,
            grid=grid,
            in_specs=[
                pl.BlockSpec((tm, tk), lambda i, j, k: (i, k)),     # x
                pl.BlockSpec((tk, tn), lambda i, j, k: (k, j)),     # W^T
                pl.BlockSpec((1, tn), lambda i, j, k: (0, j)),      # bias
                pl.BlockSpec((tk, rank), lambda i, j, k: (k, 0)),   # A^T
                pl.BlockSpec((rank, tn), lambda i, j, k: (0, j)),   # scaled B^T
            ],
            out_specs=pl.BlockSpec((tm, tn), lambda i, j, k: (i, j)),
            scratch_shapes=[
                pltpu.VMEM((tm, tn), jnp.float32),    # base accumulator
                pltpu.VMEM((tm, rank), jnp.float32),  # x @ A^T per row tile
            ],
        ),
        compiler_params=pltpu.CompilerParams(
            # M parallel (megacore); N/K must stay sequential per core: the
            # output accumulator lives across K and the x@A^T scratch computed
            # at j==0 lives across N.
            dimension_semantics=("parallel", "arbitrary", "arbitrary")),
    )(x2d, wt, bias2d, at, bt_scaled)

    if m_padded != m:
        out2d = out2d[:m]
    return out2d.reshape(*lead_shape, out_features)


def fixed_lora_linear(feature, w, bias, lora_a, lora_b, *, lora_alpha, **tiles):
    """Convenience one-shot wrapper. In a real model, call
    prepare_fixed_lora_linear_params once and reuse the result."""
    params = prepare_fixed_lora_linear_params(w, bias, lora_a, lora_b, lora_alpha)
    return fixed_lora_linear_apply(feature, *params, **tiles)


if __name__ == "__main__":
    # Deterministic synthetic config. Sizes chosen small but large enough to
    # exercise the 3-D tiling: grid = (2 row tiles, 3 col tiles, 2 K tiles)
    # plus an M-padding remainder (m = 120 -> padded 128).
    batch, seq = 2, 60
    in_features = 1024
    out_features = 384
    fixed_lora_rank = 8
    lora_alpha = 16.0

    key = jax.random.PRNGKey(0)
    k_x, k_w, k_b, k_a, k_bb = jax.random.split(key, 5)

    # Frozen base Linear params (torch default: U(-1/sqrt(in), 1/sqrt(in))).
    bound_w = 1.0 / jnp.sqrt(jnp.float32(in_features))
    w = jax.random.uniform(k_w, (out_features, in_features), jnp.float32,
                           -bound_w, bound_w)
    bias = jax.random.uniform(k_b, (out_features,), jnp.float32,
                              -bound_w, bound_w)

    # LoRA A: kaiming_uniform_ default -> U(-sqrt(6/fan_in), sqrt(6/fan_in)).
    bound_a = jnp.sqrt(jnp.float32(6.0 / in_features))
    lora_a = jax.random.uniform(k_a, (fixed_lora_rank, in_features), jnp.float32,
                                -bound_a, bound_a)
    # LoRA B: zeros_ in the module; use small nonzero values here so the LoRA
    # path is numerically visible in the check.
    lora_b = 0.01 * jax.random.normal(k_bb, (out_features, fixed_lora_rank),
                                      jnp.float32)

    x = jax.random.normal(k_x, (batch, seq, in_features), jnp.float32)

    # Prepare weights once (hoisted), then run the Pallas forward.
    params = prepare_fixed_lora_linear_params(w, bias, lora_a, lora_b, lora_alpha)
    out = fixed_lora_linear_apply(x, *params)
    out = jax.block_until_ready(out)

    # Pure-JAX reference (eval mode: dropout is identity).
    scale = lora_alpha / fixed_lora_rank
    ref = (x @ w.T + bias) + ((x @ lora_a.T) @ lora_b.T) * scale

    assert out.shape == (batch, seq, out_features)
    max_err = jnp.max(jnp.abs(out - ref))
    assert max_err < 1e-2, f"mismatch vs reference: max abs err {max_err}"

    print("KERNEL_OK")
</pallas_src>

<mosaic_0001>
module attributes {stable_mosaic.version = 11 : i64} {
  func.func @_lora_linear_kernel(%arg0: i32, %arg1: i32, %arg2: i32, %arg3: memref<64x512xf32, #tpu.memory_space<vmem>>, %arg4: memref<512x128xf32, #tpu.memory_space<vmem>>, %arg5: memref<1x128xf32, #tpu.memory_space<vmem>>, %arg6: memref<512x8xf32, #tpu.memory_space<vmem>>, %arg7: memref<8x128xf32, #tpu.memory_space<vmem>>, %arg8: memref<64x128xf32, #tpu.memory_space<vmem>>, %arg9: memref<64x128xf32, #tpu.memory_space<vmem>>, %arg10: memref<64x8xf32, #tpu.memory_space<vmem>>) attributes {dimension_semantics = [#tpu.dimension_semantics<parallel>, #tpu.dimension_semantics<arbitrary>, #tpu.dimension_semantics<arbitrary>], iteration_bounds = array<i64: 2, 3, 2>, scalar_prefetch = 0 : i64, scratch_operands = 2 : i64, tpu.core_type = #tpu.core_type<tc>, window_params = [{transform_indices = @transform_0, window_bounds = array<i64: 64, 512>}, {transform_indices = @transform_1, window_bounds = array<i64: 512, 128>}, {transform_indices = @transform_2, window_bounds = array<i64: 1, 128>}, {transform_indices = @transform_3, window_bounds = array<i64: 512, 8>}, {transform_indices = @transform_4, window_bounds = array<i64: 8, 128>}, {transform_indices = @transform_5, window_bounds = array<i64: 64, 128>}]} {
    %c0_i32 = arith.constant 0 : i32
    %0 = arith.cmpi eq, %arg2, %c0_i32 : i32
    %1 = arith.extui %0 : i1 to i32
    %c0_i32_0 = arith.constant 0 : i32
    %2 = arith.cmpi ne, %1, %c0_i32_0 : i32
    scf.if %2 {
      %cst_14 = arith.constant 0.000000e+00 : f32
      %20 = vector.broadcast %cst_14 : f32 to vector<64x128xf32>
      %c0_15 = arith.constant 0 : index
      %c0_16 = arith.constant 0 : index
      %21 = vector.load %arg9[%c0_15, %c0_16] : memref<64x128xf32, #tpu.memory_space<vmem>>, vector<64x128xf32>
      tpu.vector_store %arg9[%c0_15, %c0_16], %20 {strides = array<i32>} : memref<64x128xf32, #tpu.memory_space<vmem>>, vector<64x128xf32>,
    } else {
    }
    %c0_i32_1 = arith.constant 0 : i32
    %3 = arith.cmpi eq, %arg1, %c0_i32_1 : i32
    %c0_i32_2 = arith.constant 0 : i32
    %4 = arith.cmpi eq, %arg2, %c0_i32_2 : i32
    %5 = arith.andi %3, %4 : i1
    %6 = arith.extui %5 : i1 to i32
    %c0_i32_3 = arith.constant 0 : i32
    %7 = arith.cmpi ne, %6, %c0_i32_3 : i32
    scf.if %7 {
      %cst_14 = arith.constant 0.000000e+00 : f32
      %20 = vector.broadcast %cst_14 : f32 to vector<64x8xf32>
      %c0_15 = arith.constant 0 : index
      %c0_16 = arith.constant 0 : index
      %21 = vector.load %arg10[%c0_15, %c0_16] : memref<64x8xf32, #tpu.memory_space<vmem>>, vector<64x8xf32>
      tpu.vector_store %arg10[%c0_15, %c0_16], %20 {strides = array<i32>} : memref<64x8xf32, #tpu.memory_space<vmem>>, vector<64x8xf32>,
    } else {
    }
    %c0 = arith.constant 0 : index
    %c0_4 = arith.constant 0 : index
    %8 = vector.load %arg3[%c0, %c0_4] : memref<64x512xf32, #tpu.memory_space<vmem>>, vector<64x512xf32>
    %c0_5 = arith.constant 0 : index
    %c0_6 = arith.constant 0 : index
    %9 = vector.load %arg9[%c0_5, %c0_6] : memref<64x128xf32, #tpu.memory_space<vmem>>, vector<64x128xf32>
    %c0_7 = arith.constant 0 : index
    %c0_8 = arith.constant 0 : index
    %10 = vector.load %arg4[%c0_7, %c0_8] : memref<512x128xf32, #tpu.memory_space<vmem>>, vector<512x128xf32>
    %cst = arith.constant dense<0.000000e+00> : vector<64x128xf32>
    %11 = tpu.matmul %8, %10, %cst {dimension_numbers = #tpu.dot_dimension_numbers<[1], [0], [0], [1], [0, 0, 1, 1], [], []>} : vector<64x512xf32>, vector<512x128xf32>, vector<64x128xf32> -> vector<64x128xf32>
    %12 = arith.addf %9, %11 : vector<64x128xf32>
    %c0_9 = arith.constant 0 : index
    %c0_10 = arith.constant 0 : index
    %13 = vector.load %arg9[%c0_9, %c0_10] : memref<64x128xf32, #tpu.memory_space<vmem>>, vector<64x128xf32>
    tpu.vector_store %arg9[%c0_9, %c0_10], %12 {strides = array<i32>} : memref<64x128xf32, #tpu.memory_space<vmem>>, vector<64x128xf32>,
    %c0_i32_11 = arith.constant 0 : i32
    %14 = arith.cmpi eq, %arg1, %c0_i32_11 : i32
    %15 = arith.extui %14 : i1 to i32
    %c0_i32_12 = arith.constant 0 : i32
    %16 = arith.cmpi ne, %15, %c0_i32_12 : i32
    scf.if %16 {
      %c0_14 = arith.constant 0 : index
      %c0_15 = arith.constant 0 : index
      %20 = vector.load %arg10[%c0_14, %c0_15] : memref<64x8xf32, #tpu.memory_space<vmem>>, vector<64x8xf32>
      %c0_16 = arith.constant 0 : index
      %c0_17 = arith.constant 0 : index
      %21 = vector.load %arg6[%c0_16, %c0_17] : memref<512x8xf32, #tpu.memory_space<vmem>>, vector<512x8xf32>
      %cst_18 = arith.constant dense<0.000000e+00> : vector<64x8xf32>
      %22 = tpu.matmul %8, %21, %cst_18 {dimension_numbers = #tpu.dot_dimension_numbers<[1], [0], [0], [1], [0, 0, 1, 1], [], []>} : vector<64x512xf32>, vector<512x8xf32>, vector<64x8xf32> -> vector<64x8xf32>
      %23 = arith.addf %20, %22 : vector<64x8xf32>
      %c0_19 = arith.constant 0 : index
      %c0_20 = arith.constant 0 : index
      %24 = vector.load %arg10[%c0_19, %c0_20] : memref<64x8xf32, #tpu.memory_space<vmem>>, vector<64x8xf32>
      tpu.vector_store %arg10[%c0_19, %c0_20], %23 {strides = array<i32>} : memref<64x8xf32, #tpu.memory_space<vmem>>, vector<64x8xf32>,
    } else {
    }
    %c1_i32 = arith.constant 1 : i32
    %17 = arith.cmpi eq, %arg2, %c1_i32 : i32
    %18 = arith.extui %17 : i1 to i32
    %c0_i32_13 = arith.constant 0 : i32
    %19 = arith.cmpi ne, %18, %c0_i32_13 : i32
    scf.if %19 {
      %c0_14 = arith.constant 0 : index
      %c0_15 = arith.constant 0 : index
      %20 = vector.load %arg10[%c0_14, %c0_15] : memref<64x8xf32, #tpu.memory_space<vmem>>, vector<64x8xf32>
      %c0_16 = arith.constant 0 : index
      %c0_17 = arith.constant 0 : index
      %21 = vector.load %arg7[%c0_16, %c0_17] : memref<8x128xf32, #tpu.memory_space<vmem>>, vector<8x128xf32>
      %cst_18 = arith.constant dense<0.000000e+00> : vector<64x128xf32>
      %22 = tpu.matmul %20, %21, %cst_18 {dimension_numbers = #tpu.dot_dimension_numbers<[1], [0], [0], [1], [0, 0, 1, 1], [], []>} : vector<64x8xf32>, vector<8x128xf32>, vector<64x128xf32> -> vector<64x128xf32>
      %c0_19 = arith.constant 0 : index
      %c0_20 = arith.constant 0 : index
      %23 = vector.load %arg9[%c0_19, %c0_20] : memref<64x128xf32, #tpu.memory_space<vmem>>, vector<64x128xf32>
      %c0_21 = arith.constant 0 : index
      %c0_22 = arith.constant 0 : index
      %24 = vector.load %arg5[%c0_21, %c0_22] : memref<1x128xf32, #tpu.memory_space<vmem>>, vector<1x128xf32>
      %25 = vector.broadcast %24 : vector<1x128xf32> to vector<64x128xf32>
      %26 = arith.addf %23, %25 : vector<64x128xf32>
      %27 = arith.addf %26, %22 : vector<64x128xf32>
      %c0_23 = arith.constant 0 : index
      %c0_24 = arith.constant 0 : index
      %28 = vector.load %arg8[%c0_23, %c0_24] : memref<64x128xf32, #tpu.memory_space<vmem>>, vector<64x128xf32>
      tpu.vector_store %arg8[%c0_23, %c0_24], %27 {strides = array<i32>} : memref<64x128xf32, #tpu.memory_space<vmem>>, vector<64x128xf32>,
    } else {
    }
    return
  }
  func.func @transform_0(%arg0: i32, %arg1: i32, %arg2: i32) -> (i32, i32) {
    %c0_i32 = arith.constant 0 : i32
    return %arg0, %arg2 : i32, i32
  }
  func.func @transform_1(%arg0: i32, %arg1: i32, %arg2: i32) -> (i32, i32) {
    %c0_i32 = arith.constant 0 : i32
    return %arg2, %arg1 : i32, i32
  }
  func.func @transform_2(%arg0: i32, %arg1: i32, %arg2: i32) -> (i32, i32) {
    %c0_i32 = arith.constant 0 : i32
    %c0_i32_0 = arith.constant 0 : i32
    return %c0_i32, %arg1 : i32, i32
  }
  func.func @transform_3(%arg0: i32, %arg1: i32, %arg2: i32) -> (i32, i32) {
    %c0_i32 = arith.constant 0 : i32
    %c0_i32_0 = arith.constant 0 : i32
    return %arg2, %c0_i32 : i32, i32
  }
  func.func @transform_4(%arg0: i32, %arg1: i32, %arg2: i32) -> (i32, i32) {
    %c0_i32 = arith.constant 0 : i32
    %c0_i32_0 = arith.constant 0 : i32
    return %c0_i32, %arg1 : i32, i32
  }
  func.func @transform_5(%arg0: i32, %arg1: i32, %arg2: i32) -> (i32, i32) {
    %c0_i32 = arith.constant 0 : i32
    return %arg0, %arg1 : i32, i32
  }
}

</mosaic_0001>

<llo_original>
// kernel: tpu_custom_call.1
$region0: #{tpu_custom_call.1}
  #allocation0 [shape = 'u32[]', space=smem, size = 0x4, offset = 0x4, fixed_abs, tag = 'smem constant byte address 0x4 - core index']
  #allocation1 [shape = 'u32[144,128]{1,0:T(1,128)}', space=vmem, size = 0x12000, scoped, tag = 'internal scratch']
  #allocation2 [shape = 'f32[64,128]{1,0:T(8,128)}', space=vmem, size = 0x8000, scoped, tag = 'scratch operand']
  #allocation3 [shape = 'f32[64,8]{1,0:T(8,128)}', space=vmem, size = 0x8000, scoped, tag = 'scratch operand']
  %s0 = inlined_call_operand.hbm [shape: f32[128,1024], index: 0, kind: input, shape index: {}]
  %s1 = inlined_call_operand.hbm [shape: f32[1024,384], index: 1, kind: input, shape index: {}]
  %s2 = inlined_call_operand.hbm [shape: f32[1,384], index: 2, kind: input, shape index: {}]
  %s3 = inlined_call_operand.vmem [shape: f32[1024,8], index: 3, kind: input, shape index: {}]
  %s4 = inlined_call_operand.hbm [shape: f32[8,384], index: 4, kind: input, shape index: {}]
  %s5 = inlined_call_operand.hbm [shape: f32[128,384], index: 5, kind: output, shape index: {}]
  %s6 = sld [smem:[#allocation0]]
  $region85: #{tpu_custom_call.1} parent=0
    _
  %s8 = ssub.s32 1, %s6
  %s9 = scalar_select 0, %s8, %s6
  $region1: #{tpu_custom_call.1} parent=0
    #allocation4 [shape = 'u8[262144]{0}', space=vmem, size = 0x40000, scoped, tag = 'input window, operand 0']
    #allocation5 [shape = 's32[2]{0}', space=sflag, size = 0x8, scoped, tag = 'scoped memory for tpu_custom_call.1']
    #allocation6 [shape = 's32[2]{0}', space=sflag, size = 0x8, scoped, tag = 'scoped memory for tpu_custom_call.1']
    #allocation7 [shape = 'u8[524288]{0}', space=vmem, size = 0x80000, scoped, tag = 'input window, operand 1']
    #allocation8 [shape = 's32[2]{0}', space=sflag, size = 0x8, scoped, tag = 'scoped memory for tpu_custom_call.1']
    #allocation9 [shape = 'u8[1024]{0}', space=vmem, size = 0x400, scoped, tag = 'input window, operand 2']
    #allocation10 [shape = 'u8[8192]{0}', space=vmem, size = 0x2000, scoped, tag = 'input window, operand 4']
    #allocation11 [shape = 's32[2]{0}', space=sflag, size = 0x8, scoped, tag = 'scoped memory for tpu_custom_call.1']
    #allocation12 [shape = 'u8[65536]{0}', space=vmem, size = 0x10000, scoped, tag = 'output window, operand 0']
    %10 = vsyncpa [#allocation5], 0
    %s11 = scalar_lea.sflag [#allocation5], 1
    %12 = vsyncpa %s11, 0
    %13 = vsyncpa [#allocation8], 0
    %s14 = scalar_lea.sflag [#allocation8], 1
    %15 = vsyncpa %s14, 0
    %16 = vsyncpa [#allocation11], 0
    %s17 = scalar_lea.sflag [#allocation11], 1
    %18 = vsyncpa %s17, 0
    %19 = vsyncpa [#allocation6], 0
    %s20 = scalar_lea.sflag [#allocation6], 1
    %21 = vsyncpa %s20, 0
    loop: start=0, step=1, limit=14
    $region2: #{tpu_custom_call.1} parent=1 // loop_pre_header
      _
    $region3: #{tpu_custom_call.1} parent=1 // loop_header
      %s23 = sphi 0, %s27
      %p24 = scmp.ge.s32.totalorder %s23, 14
      %s30 = sphi 0, %s49
      %s31 = sphi 0, %s45
      %s32 = sphi 0, %s41
      %s33 = sphi 0, %s30
      %s34 = sphi 0, %s31
      %s35 = sphi 0, %s32
      %s36 = sphi 0, %s33
      %s37 = sphi 0, %s34
      %s38 = sphi 0, %s35
      %s54 = sphi 0, %s56
      %s57 = sphi 0, %s54
      %s58 = sphi 0, %s57
      %s74 = sphi 0, %s58
      %s82 = sphi 0, %s84
      %s85 = sphi 0, %s82
      %s86 = sphi 0, %s85
      %s102 = sphi 0, %s86
      %s108 = sphi 0, %s110
      %s111 = sphi 0, %s108
      %s112 = sphi 0, %s111
      %s128 = sphi 0, %s112
      %s134 = sphi 0, %s136
      %s137 = sphi 0, %s134
      %s138 = sphi 0, %s137
      %s154 = sphi 0, %s138
      %s160 = sphi 0, %s162
      %s163 = sphi 0, %s160
      %s164 = sphi 0, %s163
      %s180 = sphi 0, %s164
      %s188 = sphi 0, %s190
      %s191 = sphi 0, %s188
      %s192 = sphi 0, %s191
      %s208 = sphi 0, %s192
    $region4: #{tpu_custom_call.1} parent=1 // loop_header_branch
      %26 = sbr.rel (%p24) target = $region8
    $region5: #{tpu_custom_call.1} parent=1 // loop_body
      %s28 = ssub.s32 %s23, 1
      %s29 = ssub.s32 %s23, 2
      %s39 = sadd.s32 1, %s32
      %p40 = scmp.ge.s32.totalorder %s39, 2
      %s41 = scalar_select %p40, 0, %s39
      %s42 = sadd.s32 1, %s31
      %s43 = scalar_select %p40, %s42, %s31
      %p44 = scmp.ge.s32.totalorder %s43, 3
      %s45 = scalar_select %p44, 0, %s43
      %s46 = sadd.s32 1, %s30
      %s47 = scalar_select %p44, %s46, %s30
      %p48 = scmp.ge.s32.totalorder %s47, 2
      %s49 = scalar_select %p48, 0, %s47
      %s50 = ssub.s32 %s30, %s49
      %s51 = ssub.s32 %s32, %s41
      %s52 = sor.u32 %s50, %s51
      %p53 = scmp.eq.s32.totalorder %s52, 0
      %s55 = sadd.s32 %s54, 1
      %s56 = scalar_select %p53, %s54, %s55
      %p59 = pneg %p53
      %p60 = scmp.eq.s32.totalorder %s23, 11
      %p61 = por %p59, %p60
      %p62 = scmp.ne.s32.totalorder %s54, %s57
      %p63 = scmp.eq.s32.totalorder %s23, 0
      %p64 = por %p62, %p63
      %p65 = scmp.ne.s32.totalorder %s54, %s57
      %p66 = scmp.eq.s32.totalorder %s28, 11
      %p67 = por %p65, %p66
      %p68 = scmp.ne.s32.totalorder %s57, %s58
      %p69 = scmp.eq.s32.totalorder %s28, 0
      %p70 = por %p68, %p69
      %p71 = scmp.ne.s32.totalorder %s57, %s58
      %p72 = scmp.eq.s32.totalorder %s29, 11
      %p73 = por %p71, %p72
      %p75 = scmp.ne.s32.totalorder %s58, %s74
      %p76 = scmp.eq.s32.totalorder %s29, 0
      %p77 = por %p75, %p76
      %s78 = ssub.s32 %s32, %s41
      %s79 = ssub.s32 %s31, %s45
      %s80 = sor.u32 %s78, %s79
      %p81 = scmp.eq.s32.totalorder %s80, 0
      %s83 = sadd.s32 %s82, 1
      %s84 = scalar_select %p81, %s82, %s83
      %p87 = pneg %p81
      %p88 = scmp.eq.s32.totalorder %s23, 11
      %p89 = por %p87, %p88
      %p90 = scmp.ne.s32.totalorder %s82, %s85
      %p91 = scmp.eq.s32.totalorder %s23, 0
      %p92 = por %p90, %p91
      %p93 = scmp.ne.s32.totalorder %s82, %s85
      %p94 = scmp.eq.s32.totalorder %s28, 11
      %p95 = por %p93, %p94
      %p96 = scmp.ne.s32.totalorder %s85, %s86
      %p97 = scmp.eq.s32.totalorder %s28, 0
      %p98 = por %p96, %p97
      %p99 = scmp.ne.s32.totalorder %s85, %s86
      %p100 = scmp.eq.s32.totalorder %s29, 11
      %p101 = por %p99, %p100
      %p103 = scmp.ne.s32.totalorder %s86, %s102
      %p104 = scmp.eq.s32.totalorder %s29, 0
      %p105 = por %p103, %p104
      %s106 = ssub.s32 %s31, %s45
      %p107 = scmp.eq.s32.totalorder %s106, 0
      %s109 = sadd.s32 %s108, 1
      %s110 = scalar_select %p107, %s108, %s109
      %p113 = pneg %p107
      %p114 = scmp.eq.s32.totalorder %s23, 11
      %p115 = por %p113, %p114
      %p116 = scmp.ne.s32.totalorder %s108, %s111
      %p117 = scmp.eq.s32.totalorder %s23, 0
      %p118 = por %p116, %p117
      %p119 = scmp.ne.s32.totalorder %s108, %s111
      %p120 = scmp.eq.s32.totalorder %s28, 11
      %p121 = por %p119, %p120
      %p122 = scmp.ne.s32.totalorder %s111, %s112
      %p123 = scmp.eq.s32.totalorder %s28, 0
      %p124 = por %p122, %p123
      %p125 = scmp.ne.s32.totalorder %s111, %s112
      %p126 = scmp.eq.s32.totalorder %s29, 11
      %p127 = por %p125, %p126
      %p129 = scmp.ne.s32.totalorder %s112, %s128
      %p130 = scmp.eq.s32.totalorder %s29, 0
      %p131 = por %p129, %p130
      %s132 = ssub.s32 %s32, %s41
      %p133 = scmp.eq.s32.totalorder %s132, 0
      %s135 = sadd.s32 %s134, 1
      %s136 = scalar_select %p133, %s134, %s135
      %p139 = pneg %p133
      %p140 = scmp.eq.s32.totalorder %s23, 11
      %p141 = por %p139, %p140
      %p142 = scmp.ne.s32.totalorder %s134, %s137
      %p143 = scmp.eq.s32.totalorder %s23, 0
      %p144 = por %p142, %p143
      %p145 = scmp.ne.s32.totalorder %s134, %s137
      %p146 = scmp.eq.s32.totalorder %s28, 11
      %p147 = por %p145, %p146
      %p148 = scmp.ne.s32.totalorder %s137, %s138
      %p149 = scmp.eq.s32.totalorder %s28, 0
      %p150 = por %p148, %p149
      %p151 = scmp.ne.s32.totalorder %s137, %s138
      %p152 = scmp.eq.s32.totalorder %s29, 11
      %p153 = por %p151, %p152
      %p155 = scmp.ne.s32.totalorder %s138, %s154
      %p156 = scmp.eq.s32.totalorder %s29, 0
      %p157 = por %p155, %p156
      %s158 = ssub.s32 %s31, %s45
      %p159 = scmp.eq.s32.totalorder %s158, 0
      %s161 = sadd.s32 %s160, 1
      %s162 = scalar_select %p159, %s160, %s161
      %p165 = pneg %p159
      %p166 = scmp.eq.s32.totalorder %s23, 11
      %p167 = por %p165, %p166
      %p168 = scmp.ne.s32.totalorder %s160, %s163
      %p169 = scmp.eq.s32.totalorder %s23, 0
      %p170 = por %p168, %p169
      %p171 = scmp.ne.s32.totalorder %s160, %s163
      %p172 = scmp.eq.s32.totalorder %s28, 11
      %p173 = por %p171, %p172
      %p174 = scmp.ne.s32.totalorder %s163, %s164
      %p175 = scmp.eq.s32.totalorder %s28, 0
      %p176 = por %p174, %p175
      %p177 = scmp.ne.s32.totalorder %s163, %s164
      %p178 = scmp.eq.s32.totalorder %s29, 11
      %p179 = por %p177, %p178
      %p181 = scmp.ne.s32.totalorder %s164, %s180
      %p182 = scmp.eq.s32.totalorder %s29, 0
      %p183 = por %p181, %p182
      %s184 = ssub.s32 %s30, %s49
      %s185 = ssub.s32 %s31, %s45
      %s186 = sor.u32 %s184, %s185
      %p187 = scmp.eq.s32.totalorder %s186, 0
      %s189 = sadd.s32 %s188, 1
      %s190 = scalar_select %p187, %s188, %s189
      %p193 = pneg %p187
      %p194 = scmp.eq.s32.totalorder %s23, 11
      %p195 = por %p193, %p194
      %p196 = scmp.ne.s32.totalorder %s188, %s191
      %p197 = scmp.eq.s32.totalorder %s23, 0
      %p198 = por %p196, %p197
      %p199 = scmp.ne.s32.totalorder %s188, %s191
      %p200 = scmp.eq.s32.totalorder %s28, 11
      %p201 = por %p199, %p200
      %p202 = scmp.ne.s32.totalorder %s191, %s192
      %p203 = scmp.eq.s32.totalorder %s28, 0
      %p204 = por %p202, %p203
      %p205 = scmp.ne.s32.totalorder %s191, %s192
      %p206 = scmp.eq.s32.totalorder %s29, 11
      %p207 = por %p205, %p206
      %p209 = scmp.ne.s32.totalorder %s192, %s208
      %p210 = scmp.eq.s32.totalorder %s29, 0
      %p211 = por %p209, %p210
      %p212 = scmp.le.s32.totalorder 1, %s23
      %p213 = scmp.lt.s32.totalorder %s23, 13
      %p214 = pnand %p212, %p213
      %p215 = pneg %p214
      // Predicated region
      $region9: #{tpu_custom_call.1} parent=5 // pred_check
        _
      $region10: #{tpu_custom_call.1} parent=5 // pred_check_branch
        %217 = sbr.rel (%p214) target = $region12
      $region11: #{tpu_custom_call.1} parent=5 // pred_region
        %s218 = ssub.s32 %s23, 1
      $region12: #{tpu_custom_call.1} parent=5 // pred_fallthru
        _
      %p219 = scmp.lt.s32.totalorder %s23, 12
      // Predicated region
      $region13: #{tpu_custom_call.1} parent=5 // pred_check
        %p220 = pneg %p219
      $region14: #{tpu_custom_call.1} parent=5 // pred_check_branch
        %222 = sbr.rel (%p220) target = $region16
      $region15: #{tpu_custom_call.1} parent=5 // pred_region
        // Predicated region
        $region17: #{tpu_custom_call.1} parent=15 // pred_check
          %p223 = pneg %p64
        $region18: #{tpu_custom_call.1} parent=15 // pred_check_branch
          %225 = sbr.rel (%p223) target = $region20
        $region19: #{tpu_custom_call.1} parent=15 // pred_region
          %s226 = sand.u32 %s54, 1
          %s227 = scalar_lea.sflag [#allocation5], %s226
          %s228 = sand.u32 %s54, 1
          %s229 = smul.addr %s228, 256
          %s230 = scalar_lea.vmem [#allocation4], %s229
          %s231 = smul.u32 8, %s30
          %s232 = smul.u32 4, %s32
          %s234 = ssub.s32 4096, 4096
          %235 = vsyncadd %s227, %s234
          %s236 = smul.addr %s231, 8
          %s237 = sadd.s32 %s232, %s236
          %s238 = smul.addr %s237, 128
          %s239 = scalar_lea.hbm %s0, %s238
          %s240 = sshll.u32 %s230, 4
          %s241 = int_to_ptr.vmem [resolvable:$true] %s240
          %246 = dma.hbm_to_vmem [thread:$0]  %s239, 4096, %s241, %s227, 1024, 512, 32
        $region20: #{tpu_custom_call.1} parent=15 // pred_fallthru
          _
        // Predicated region
        $region21: #{tpu_custom_call.1} parent=15 // pred_check
          %p247 = pneg %p92
        $region22: #{tpu_custom_call.1} parent=15 // pred_check_branch
          %249 = sbr.rel (%p247) target = $region24
        $region23: #{tpu_custom_call.1} parent=15 // pred_region
          %s250 = sand.u32 %s23, 1
          %s251 = scalar_lea.sflag [#allocation8], %s250
          %s252 = sand.u32 %s82, 1
          %s253 = smul.addr %s252, 512
          %s254 = scalar_lea.vmem [#allocation7], %s253
          %s255 = smul.u32 64, %s32
          %s257 = ssub.s32 8192, 8192
          %258 = vsyncadd %s251, %s257
          %s259 = smul.addr %s255, 3
          %s260 = sadd.s32 %s31, %s259
          %s261 = smul.addr %s260, 128
          %s262 = scalar_lea.hbm %s1, %s261
          %s263 = sshll.u32 %s254, 4
          %s264 = int_to_ptr.vmem [resolvable:$true] %s263
          %269 = dma.hbm_to_vmem [thread:$0]  %s262, 8192, %s264, %s251, 384, 128, 8
        $region24: #{tpu_custom_call.1} parent=15 // pred_fallthru
          _
        // Predicated region
        $region25: #{tpu_custom_call.1} parent=15 // pred_check
          %p270 = pneg %p118
        $region26: #{tpu_custom_call.1} parent=15 // pred_check_branch
          %272 = sbr.rel (%p270) target = $region28
        $region27: #{tpu_custom_call.1} parent=15 // pred_region
          %s273 = sand.u32 %s23, 1
          %s274 = scalar_lea.sflag [#allocation8], %s273
          %s275 = sand.u32 %s108, 1
          %s276 = scalar_lea.vmem [#allocation9], %s275
          %s278 = ssub.s32 16, 16
          %279 = vsyncadd %s274, %s278
          %s280 = smul.addr %s31, 16
          %s281 = scalar_lea.hbm %s2, %s280
          %s283 = sshll.u32 %s276, 4
          %s284 = int_to_ptr.vmem [resolvable:$true] %s283
          %286 = dma.hbm_to_vmem [thread:$0]  %s281, 16, %s284, %s274
        $region28: #{tpu_custom_call.1} parent=15 // pred_fallthru
          _
        // Predicated region
        $region29: #{tpu_custom_call.1} parent=15 // pred_check
          %p287 = pneg %p144
        $region30: #{tpu_custom_call.1} parent=15 // pred_check_branch
          %289 = sbr.rel (%p287) target = $region32
        $region31: #{tpu_custom_call.1} parent=15 // pred_region
          %s290 = smul.u32 64, %s32
          %p291 = scmp.lt.s32.totalorder %s290, 127
          %s292 = scalar_select %p291, %s290, 127
          %s293 = smul.addr %s292, 8
          %s294 = scalar_lea.vmem %s3, %s293
          %s295 = smul.u32 64, %s32
        $region32: #{tpu_custom_call.1} parent=15 // pred_fallthru
          _
        // Predicated region
        $region33: #{tpu_custom_call.1} parent=15 // pred_check
          %p296 = pneg %p170
        $region34: #{tpu_custom_call.1} parent=15 // pred_check_branch
          %298 = sbr.rel (%p296) target = $region36
        $region35: #{tpu_custom_call.1} parent=15 // pred_region
          %s299 = sand.u32 %s160, 1
          %s300 = scalar_lea.sflag [#allocation11], %s299
          %s301 = sand.u32 %s160, 1
          %s302 = smul.addr %s301, 8
          %s303 = scalar_lea.vmem [#allocation10], %s302
          %s305 = ssub.s32 128, 128
          %306 = vsyncadd %s300, %s305
          %s307 = smul.addr %s31, 128
          %s308 = scalar_lea.hbm %s4, %s307
          %s310 = sshll.u32 %s303, 4
          %s311 = int_to_ptr.vmem [resolvable:$true] %s310
          %313 = dma.hbm_to_vmem [thread:$0]  %s308, 128, %s311, %s300
        $region36: #{tpu_custom_call.1} parent=15 // pred_fallthru
          _
      $region16: #{tpu_custom_call.1} parent=5 // pred_fallthru
        _
      %p314 = scmp.le.s32.totalorder 1, %s23
      %p315 = scmp.lt.s32.totalorder %s23, 13
      %p316 = pnand %p314, %p315
      %p317 = pneg %p316
      // Predicated region
      $region37: #{tpu_custom_call.1} parent=5 // pred_check
        _
      $region38: #{tpu_custom_call.1} parent=5 // pred_check_branch
        %319 = sbr.rel (%p316) target = $region40
      $region39: #{tpu_custom_call.1} parent=5 // pred_region
        %s320 = ssub.s32 %s23, 1
        %s321 = sand.u32 %s57, 1
        %s322 = scalar_lea.sflag [#allocation5], %s321
        %s323 = sand.u32 %s57, 1
        %s324 = smul.addr %s323, 256
        %s325 = scalar_lea.vmem [#allocation4], %s324
        // Predicated region
        $region41: #{tpu_custom_call.1} parent=39 // pred_check
          %p326 = pneg %p70
        $region42: #{tpu_custom_call.1} parent=39 // pred_check_branch
          %328 = sbr.rel (%p326) target = $region44
        $region43: #{tpu_custom_call.1} parent=39 // pred_region
          %329 = dma.done %s322, 4096
        $region44: #{tpu_custom_call.1} parent=39 // pred_fallthru
          _
        %s330 = sand.u32 %s28, 1
        %s331 = scalar_lea.sflag [#allocation8], %s330
        %s332 = sand.u32 %s85, 1
        %s333 = smul.addr %s332, 512
        %s334 = scalar_lea.vmem [#allocation7], %s333
        // Predicated region
        $region45: #{tpu_custom_call.1} parent=39 // pred_check
          %p335 = pneg %p98
        $region46: #{tpu_custom_call.1} parent=39 // pred_check_branch
          %337 = sbr.rel (%p335) target = $region48
        $region47: #{tpu_custom_call.1} parent=39 // pred_region
          %338 = dma.done %s331, 8192
        $region48: #{tpu_custom_call.1} parent=39 // pred_fallthru
          _
        %s339 = sand.u32 %s28, 1
        %s340 = scalar_lea.sflag [#allocation8], %s339
        %s341 = sand.u32 %s111, 1
        %s342 = scalar_lea.vmem [#allocation9], %s341
        // Predicated region
        $region49: #{tpu_custom_call.1} parent=39 // pred_check
          %p343 = pneg %p124
        $region50: #{tpu_custom_call.1} parent=39 // pred_check_branch
          %345 = sbr.rel (%p343) target = $region52
        $region51: #{tpu_custom_call.1} parent=39 // pred_region
          %346 = dma.done %s340, 16
        $region52: #{tpu_custom_call.1} parent=39 // pred_fallthru
          _
        %s347 = sand.u32 %s163, 1
        %s348 = scalar_lea.sflag [#allocation11], %s347
        %s349 = sand.u32 %s163, 1
        %s350 = smul.addr %s349, 8
        %s351 = scalar_lea.vmem [#allocation10], %s350
        // Predicated region
        $region53: #{tpu_custom_call.1} parent=39 // pred_check
          %p352 = pneg %p176
        $region54: #{tpu_custom_call.1} parent=39 // pred_check_branch
          %354 = sbr.rel (%p352) target = $region56
        $region55: #{tpu_custom_call.1} parent=39 // pred_region
          %355 = dma.done %s348, 128
        $region56: #{tpu_custom_call.1} parent=39 // pred_fallthru
          _
        %s356 = sand.u32 %s57, 1
        %s357 = scalar_lea.sflag [#allocation5], %s356
        %s358 = sand.u32 %s57, 1
        %s359 = smul.addr %s358, 256
        %s360 = scalar_lea.vmem [#allocation4], %s359
        %p361 = pneg %p70
        %p362 = pneg %p67
        %s363 = sand.u32 %s28, 1
        %s364 = scalar_lea.sflag [#allocation8], %s363
        %s365 = sand.u32 %s85, 1
        %s366 = smul.addr %s365, 512
        %s367 = scalar_lea.vmem [#allocation7], %s366
        %p368 = pneg %p98
        %p369 = pneg %p95
        %s370 = sand.u32 %s28, 1
        %s371 = scalar_lea.sflag [#allocation8], %s370
        %s372 = sand.u32 %s111, 1
        %s373 = scalar_lea.vmem [#allocation9], %s372
        %p374 = pneg %p124
        %p375 = pneg %p121
        %s376 = smul.u32 64, %s35
        %p377 = scmp.lt.s32.totalorder %s376, 127
        %s378 = scalar_select %p377, %s376, 127
        %s379 = smul.addr %s378, 8
        %s380 = scalar_lea.vmem %s3, %s379
        %p381 = pneg %p150
        %p382 = pneg %p147
        %s383 = sand.u32 %s163, 1
        %s384 = scalar_lea.sflag [#allocation11], %s383
        %s385 = sand.u32 %s163, 1
        %s386 = smul.addr %s385, 8
        %s387 = scalar_lea.vmem [#allocation10], %s386
        %p388 = pneg %p176
        %p389 = pneg %p173
        %p390 = pneg %p204
        %p391 = pneg %p201
        %s392 = sand.u32 %s191, 1
        %s393 = scalar_lea.sflag [#allocation6], %s392
        %s394 = sand.u32 %s191, 1
        %s395 = smul.addr %s394, 64
        %s396 = scalar_lea.vmem [#allocation12], %s395
        %s397 = smul.u32 8, %s33
        %s398 = smul.u32 4, %s35
        %s399 = smul.u32 64, %s35
        %s400 = smul.u32 64, %s35
        %p401 = scmp.lt.s32.totalorder %s400, 127
        %s402 = scalar_select %p401, %s400, 127
        %s403 = smul.addr %s402, 8
        %s404 = scalar_lea.vmem %s3, %s403
        %s405 = smul.u32 64, %s35
        %s406 = smul.u32 8, %s33
        %p407 = scmp.eq.s32.totalorder %s35, 0
        // Predicated region
        $region57: #{tpu_custom_call.1} parent=39 // pred_check
          %p408 = pneg %p407
        $region58: #{tpu_custom_call.1} parent=39 // pred_check_branch
          %410 = sbr.rel (%p408) target = $region60
        $region59: #{tpu_custom_call.1} parent=39 // pred_region
          %411 = vst [vmem:[#allocation2] sm:$0xff] 0.0
          %412 = vst [vmem:[#allocation2 + $0x8] sm:$0xff] 0.0
          %413 = vst [vmem:[#allocation2 + $0x10] sm:$0xff] 0.0
          %414 = vst [vmem:[#allocation2 + $0x18] sm:$0xff] 0.0
          %415 = vst [vmem:[#allocation2 + $0x20] sm:$0xff] 0.0
          %416 = vst [vmem:[#allocation2 + $0x28] sm:$0xff] 0.0
          %417 = vst [vmem:[#allocation2 + $0x30] sm:$0xff] 0.0
          %418 = vst [vmem:[#allocation2 + $0x38] sm:$0xff] 0.0
        $region60: #{tpu_custom_call.1} parent=39 // pred_fallthru
          _
        %p419 = scmp.eq.s32.totalorder %s34, 0
        %p420 = pnand %p419, %p407
        %p421 = pneg %p420
        // Predicated region
        $region61: #{tpu_custom_call.1} parent=39 // pred_check
          _
        $region62: #{tpu_custom_call.1} parent=39 // pred_check_branch
          %423 = sbr.rel (%p420) target = $region64
        $region63: #{tpu_custom_call.1} parent=39 // pred_region
          %vm424 = vcmask 64512
          %425 = vst.msk [vmem:[#allocation3] sm:$0xff] %vm424, 0.0
          %426 = vst.msk [vmem:[#allocation3 + $0x8] sm:$0xff] %vm424, 0.0
          %427 = vst.msk [vmem:[#allocation3 + $0x10] sm:$0xff] %vm424, 0.0
          %428 = vst.msk [vmem:[#allocation3 + $0x18] sm:$0xff] %vm424, 0.0
          %429 = vst.msk [vmem:[#allocation3 + $0x20] sm:$0xff] %vm424, 0.0
          %430 = vst.msk [vmem:[#allocation3 + $0x28] sm:$0xff] %vm424, 0.0
          %431 = vst.msk [vmem:[#allocation3 + $0x30] sm:$0xff] %vm424, 0.0
          %432 = vst.msk [vmem:[#allocation3 + $0x38] sm:$0xff] %vm424, 0.0
        $region64: #{tpu_custom_call.1} parent=39 // pred_fallthru
          _
        %v433 = vld [vmem:[%s325] sm:$0xff]
        %v434 = vld [vmem:[%s325 + $0x8] sm:$0xff]
        %v435 = vld [vmem:[%s325 + $0x10] sm:$0xff]
        %v436 = vld [vmem:[%s325 + $0x18] sm:$0xff]
        %v437 = vld [vmem:[%s325 + $0x20] sm:$0xff]
        %v438 = vld [vmem:[%s325 + $0x28] sm:$0xff]
        %v439 = vld [vmem:[%s325 + $0x30] sm:$0xff]
        %v440 = vld [vmem:[%s325 + $0x38] sm:$0xff]
        %v441 = vld [vmem:[%s325 + $0x40] sm:$0xff]
        %v442 = vld [vmem:[%s325 + $0x48] sm:$0xff]
        %v443 = vld [vmem:[%s325 + $0x50] sm:$0xff]
        %v444 = vld [vmem:[%s325 + $0x58] sm:$0xff]
        %v445 = vld [vmem:[%s325 + $0x60] sm:$0xff]
        %v446 = vld [vmem:[%s325 + $0x68] sm:$0xff]
        %v447 = vld [vmem:[%s325 + $0x70] sm:$0xff]
        %v448 = vld [vmem:[%s325 + $0x78] sm:$0xff]
        %v449 = vld [vmem:[%s325 + $0x80] sm:$0xff]
        %v450 = vld [vmem:[%s325 + $0x88] sm:$0xff]
        %v451 = vld [vmem:[%s325 + $0x90] sm:$0xff]
        %v452 = vld [vmem:[%s325 + $0x98] sm:$0xff]
        %v453 = vld [vmem:[%s325 + $0xa0] sm:$0xff]
        %v454 = vld [vmem:[%s325 + $0xa8] sm:$0xff]
        %v455 = vld [vmem:[%s325 + $0xb0] sm:$0xff]
        %v456 = vld [vmem:[%s325 + $0xb8] sm:$0xff]
        %v457 = vld [vmem:[%s325 + $0xc0] sm:$0xff]
        %v458 = vld [vmem:[%s325 + $0xc8] sm:$0xff]
        %v459 = vld [vmem:[%s325 + $0xd0] sm:$0xff]
        %v460 = vld [vmem:[%s325 + $0xd8] sm:$0xff]
        %v461 = vld [vmem:[%s325 + $0xe0] sm:$0xff]
        %v462 = vld [vmem:[%s325 + $0xe8] sm:$0xff]
        %v463 = vld [vmem:[%s325 + $0xf0] sm:$0xff]
        %v464 = vld [vmem:[%s325 + $0xf8] sm:$0xff]
        %v465 = vld [vmem:[#allocation2] sm:$0xff]
        %v466 = vld [vmem:[#allocation2 + $0x8] sm:$0xff]
        %v467 = vld [vmem:[#allocation2 + $0x10] sm:$0xff]
        %v468 = vld [vmem:[#allocation2 + $0x18] sm:$0xff]
        %v469 = vld [vmem:[#allocation2 + $0x20] sm:$0xff]
        %v470 = vld [vmem:[#allocation2 + $0x28] sm:$0xff]
        %v471 = vld [vmem:[#allocation2 + $0x30] sm:$0xff]
        %v472 = vld [vmem:[#allocation2 + $0x38] sm:$0xff]
        %v473 = vld [vmem:[%s334] sm:$0xff]
        %v474 = vld [vmem:[%s334 + $0x8] sm:$0xff]
        %v475 = vld [vmem:[%s334 + $0x10] sm:$0xff]
        %v476 = vld [vmem:[%s334 + $0x18] sm:$0xff]
        %v477 = vld [vmem:[%s334 + $0x20] sm:$0xff]
        %v478 = vld [vmem:[%s334 + $0x28] sm:$0xff]
        %v479 = vld [vmem:[%s334 + $0x30] sm:$0xff]
        %v480 = vld [vmem:[%s334 + $0x38] sm:$0xff]
        %v481 = vld [vmem:[%s334 + $0x40] sm:$0xff]
        %v482 = vld [vmem:[%s334 + $0x48] sm:$0xff]
        %v483 = vld [vmem:[%s334 + $0x50] sm:$0xff]
        %v484 = vld [vmem:[%s334 + $0x58] sm:$0xff]
        %v485 = vld [vmem:[%s334 + $0x60] sm:$0xff]
        %v486 = vld [vmem:[%s334 + $0x68] sm:$0xff]
        %v487 = vld [vmem:[%s334 + $0x70] sm:$0xff]
        %v488 = vld [vmem:[%s334 + $0x78] sm:$0xff]
        %v489 = vld [vmem:[%s334 + $0x80] sm:$0xff]
        %v490 = vld [vmem:[%s334 + $0x88] sm:$0xff]
        %v491 = vld [vmem:[%s334 + $0x90] sm:$0xff]
        %v492 = vld [vmem:[%s334 + $0x98] sm:$0xff]
        %v493 = vld [vmem:[%s334 + $0xa0] sm:$0xff]
        %v494 = vld [vmem:[%s334 + $0xa8] sm:$0xff]
        %v495 = vld [vmem:[%s334 + $0xb0] sm:$0xff]
        %v496 = vld [vmem:[%s334 + $0xb8] sm:$0xff]
        %v497 = vld [vmem:[%s334 + $0xc0] sm:$0xff]
        %v498 = vld [vmem:[%s334 + $0xc8] sm:$0xff]
        %v499 = vld [vmem:[%s334 + $0xd0] sm:$0xff]
        %v500 = vld [vmem:[%s334 + $0xd8] sm:$0xff]
        %v501 = vld [vmem:[%s334 + $0xe0] sm:$0xff]
        %v502 = vld [vmem:[%s334 + $0xe8] sm:$0xff]
        %v503 = vld [vmem:[%s334 + $0xf0] sm:$0xff]
        %v504 = vld [vmem:[%s334 + $0xf8] sm:$0xff]
        %v505 = vld [vmem:[%s334 + $0x100] sm:$0xff]
        %v506 = vld [vmem:[%s334 + $0x108] sm:$0xff]
        %v507 = vld [vmem:[%s334 + $0x110] sm:$0xff]
        %v508 = vld [vmem:[%s334 + $0x118] sm:$0xff]
        %v509 = vld [vmem:[%s334 + $0x120] sm:$0xff]
        %v510 = vld [vmem:[%s334 + $0x128] sm:$0xff]
        %v511 = vld [vmem:[%s334 + $0x130] sm:$0xff]
        %v512 = vld [vmem:[%s334 + $0x138] sm:$0xff]
        %v513 = vld [vmem:[%s334 + $0x140] sm:$0xff]
        %v514 = vld [vmem:[%s334 + $0x148] sm:$0xff]
        %v515 = vld [vmem:[%s334 + $0x150] sm:$0xff]
        %v516 = vld [vmem:[%s334 + $0x158] sm:$0xff]
        %v517 = vld [vmem:[%s334 + $0x160] sm:$0xff]
        %v518 = vld [vmem:[%s334 + $0x168] sm:$0xff]
        %v519 = vld [vmem:[%s334 + $0x170] sm:$0xff]
        %v520 = vld [vmem:[%s334 + $0x178] sm:$0xff]
        %v521 = vld [vmem:[%s334 + $0x180] sm:$0xff]
        %v522 = vld [vmem:[%s334 + $0x188] sm:$0xff]
        %v523 = vld [vmem:[%s334 + $0x190] sm:$0xff]
        %v524 = vld [vmem:[%s334 + $0x198] sm:$0xff]
        %v525 = vld [vmem:[%s334 + $0x1a0] sm:$0xff]
        %v526 = vld [vmem:[%s334 + $0x1a8] sm:$0xff]
        %v527 = vld [vmem:[%s334 + $0x1b0] sm:$0xff]
        %v528 = vld [vmem:[%s334 + $0x1b8] sm:$0xff]
        %v529 = vld [vmem:[%s334 + $0x1c0] sm:$0xff]
        %v530 = vld [vmem:[%s334 + $0x1c8] sm:$0xff]
        %v531 = vld [vmem:[%s334 + $0x1d0] sm:$0xff]
        %v532 = vld [vmem:[%s334 + $0x1d8] sm:$0xff]
        %v533 = vld [vmem:[%s334 + $0x1e0] sm:$0xff]
        %v534 = vld [vmem:[%s334 + $0x1e8] sm:$0xff]
        %v535 = vld [vmem:[%s334 + $0x1f0] sm:$0xff]
        %v536 = vld [vmem:[%s334 + $0x1f8] sm:$0xff]
        %537 = vmatprep.subr.mxu0 0.0
        %538 = vmatpush1.msra.mxu0 %v473
        %539 = vmatprep.subr.mxu0 0.0
        %540 = vmatpush1.msra.mxu0 %v474
        %541 = vmatprep.subr.mxu0 0.0
        %542 = vmatpush1.msra.mxu0 %v475
        %543 = vmatprep.subr.mxu0 0.0
        %544 = vmatpush1.msra.mxu0 %v476
        %545 = vmatprep.subr.mxu0 0.0
        %546 = vmatpush1.msra.mxu0 %v477
        %547 = vmatprep.subr.mxu0 0.0
        %548 = vmatpush1.msra.mxu0 %v478
        %549 = vmatprep.subr.mxu0 0.0
        %550 = vmatpush1.msra.mxu0 %v479
        %551 = vmatprep.subr.mxu0 0.0
        %552 = vmatpush1.msra.mxu0 %v480
        %553 = vmatprep.subr.mxu0 0.0
        %554 = vmatpush1.msra.mxu0 %v481
        %555 = vmatprep.subr.mxu0 0.0
        %556 = vmatpush1.msra.mxu0 %v482
        %557 = vmatprep.subr.mxu0 0.0
        %558 = vmatpush1.msra.mxu0 %v483
        %559 = vmatprep.subr.mxu0 0.0
        %560 = vmatpush1.msra.mxu0 %v484
        %561 = vmatprep.subr.mxu0 0.0
        %562 = vmatpush1.msra.mxu0 %v485
        %563 = vmatprep.subr.mxu0 0.0
        %564 = vmatpush1.msra.mxu0 %v486
        %565 = vmatprep.subr.mxu0 0.0
        %566 = vmatpush1.msra.mxu0 %v487
        %567 = vmatprep.subr.mxu0 0.0
        %568 = vmatpush1.msra.mxu0 %v488
        %569 = vmatprep.subr.mxu0 0.0
        %570 = vmatpush1.msra.mxu0 %v489
        %571 = vmatprep.subr.mxu0 0.0
        %572 = vmatpush1.msra.mxu0 %v490
        %573 = vmatprep.subr.mxu0 0.0
        %574 = vmatpush1.msra.mxu0 %v491
        %575 = vmatprep.subr.mxu0 0.0
        %576 = vmatpush1.msra.mxu0 %v492
        %577 = vmatprep.subr.mxu0 0.0
        %578 = vmatpush1.msra.mxu0 %v493
        %579 = vmatprep.subr.mxu0 0.0
        %580 = vmatpush1.msra.mxu0 %v494
        %581 = vmatprep.subr.mxu0 0.0
        %582 = vmatpush1.msra.mxu0 %v495
        %583 = vmatprep.subr.mxu0 0.0
        %584 = vmatpush1.msra.mxu0 %v496
        %585 = vmatprep.subr.mxu0 0.0
        %586 = vmatpush1.msra.mxu0 %v497
        %587 = vmatprep.subr.mxu0 0.0
        %588 = vmatpush1.msra.mxu0 %v498
        %589 = vmatprep.subr.mxu0 0.0
        %590 = vmatpush1.msra.mxu0 %v499
        %591 = vmatprep.subr.mxu0 0.0
        %592 = vmatpush1.msra.mxu0 %v500
        %593 = vmatprep.subr.mxu0 0.0
        %594 = vmatpush1.msra.mxu0 %v501
        %595 = vmatprep.subr.mxu0 0.0
        %596 = vmatpush1.msra.mxu0 %v502
        %597 = vmatprep.subr.mxu0 0.0
        %598 = vmatpush1.msra.mxu0 %v503
        %599 = vmatprep.subr.mxu0 0.0
        %600 = vmatpush1.msra.mxu0 %v504
        %601 = vmatprep.mubr.f32.mxu0 %v434
        %602 = vmatmul.mubr.f32.gmra.mrb[0].mxu0 %v433
        %v603 = vpop.f32.mrb[0].mxu0
        %v604 = vadd.f32 0.0, %v603
        %v605 = vpop.f32.mrb[0].mxu0
        %606 = vmatprep.mubr.f32.mxu0 %v438
        %607 = vmatmul.mubr.f32.gmra.mrb[0].mxu0 %v437
        %v608 = vpop.f32.mrb[0].mxu0
        %v609 = vadd.f32 0.0, %v608
        %v610 = vpop.f32.mrb[0].mxu0
        %611 = vmatprep.mubr.f32.mxu0 %v442
        %612 = vmatmul.mubr.f32.gmra.mrb[0].mxu0 %v441
        %v613 = vpop.f32.mrb[0].mxu0
        %v614 = vadd.f32 0.0, %v613
        %v615 = vpop.f32.mrb[0].mxu0
        %616 = vmatprep.mubr.f32.mxu0 %v446
        %617 = vmatmul.mubr.f32.gmra.mrb[0].mxu0 %v445
        %v618 = vpop.f32.mrb[0].mxu0
        %v619 = vadd.f32 0.0, %v618
        %v620 = vpop.f32.mrb[0].mxu0
        %621 = vmatprep.mubr.f32.mxu0 %v450
        %622 = vmatmul.mubr.f32.gmra.mrb[0].mxu0 %v449
        %v623 = vpop.f32.mrb[0].mxu0
        %v624 = vadd.f32 0.0, %v623
        %v625 = vpop.f32.mrb[0].mxu0
        %626 = vmatprep.mubr.f32.mxu0 %v454
        %627 = vmatmul.mubr.f32.gmra.mrb[0].mxu0 %v453
        %v628 = vpop.f32.mrb[0].mxu0
        %v629 = vadd.f32 0.0, %v628
        %v630 = vpop.f32.mrb[0].mxu0
        %631 = vmatprep.mubr.f32.mxu0 %v458
        %632 = vmatmul.mubr.f32.gmra.mrb[0].mxu0 %v457
        %v633 = vpop.f32.mrb[0].mxu0
        %v634 = vadd.f32 0.0, %v633
        %v635 = vpop.f32.mrb[0].mxu0
        %636 = vmatprep.mubr.f32.mxu0 %v462
        %637 = vmatmul.mubr.f32.gmra.mrb[0].mxu0 %v461
        %v638 = vpop.f32.mrb[0].mxu0
        %v639 = vadd.f32 0.0, %v638
        %v640 = vpop.f32.mrb[0].mxu0
        %641 = vdwg.mxu0
        %642 = vmatprep.subr.mxu0 0.0
        %643 = vmatpush1.msra.mxu0 %v505
        %644 = vmatprep.subr.mxu0 0.0
        %645 = vmatpush1.msra.mxu0 %v506
        %646 = vmatprep.subr.mxu0 0.0
        %647 = vmatpush1.msra.mxu0 %v507
        %648 = vmatprep.subr.mxu0 0.0
        %649 = vmatpush1.msra.mxu0 %v508
        %650 = vmatprep.subr.mxu0 0.0
        %651 = vmatpush1.msra.mxu0 %v509
        %652 = vmatprep.subr.mxu0 0.0
        %653 = vmatpush1.msra.mxu0 %v510
        %654 = vmatprep.subr.mxu0 0.0
        %655 = vmatpush1.msra.mxu0 %v511
        %656 = vmatprep.subr.mxu0 0.0
        %657 = vmatpush1.msra.mxu0 %v512
        %658 = vmatprep.subr.mxu0 0.0
        %659 = vmatpush1.msra.mxu0 %v513
        %660 = vmatprep.subr.mxu0 0.0
        %661 = vmatpush1.msra.mxu0 %v514
        %662 = vmatprep.subr.mxu0 0.0
        %663 = vmatpush1.msra.mxu0 %v515
        %664 = vmatprep.subr.mxu0 0.0
        %665 = vmatpush1.msra.mxu0 %v516
        %666 = vmatprep.subr.mxu0 0.0
        %667 = vmatpush1.msra.mxu0 %v517
        %668 = vmatprep.subr.mxu0 0.0
        %669 = vmatpush1.msra.mxu0 %v518
        %670 = vmatprep.subr.mxu0 0.0
        %671 = vmatpush1.msra.mxu0 %v519
        %672 = vmatprep.subr.mxu0 0.0
        %673 = vmatpush1.msra.mxu0 %v520
        %674 = vmatprep.subr.mxu0 0.0
        %675 = vmatpush1.msra.mxu0 %v521
        %676 = vmatprep.subr.mxu0 0.0
        %677 = vmatpush1.msra.mxu0 %v522
        %678 = vmatprep.subr.mxu0 0.0
        %679 = vmatpush1.msra.mxu0 %v523
        %680 = vmatprep.subr.mxu0 0.0
        %681 = vmatpush1.msra.mxu0 %v524
        %682 = vmatprep.subr.mxu0 0.0
        %683 = vmatpush1.msra.mxu0 %v525
        %684 = vmatprep.subr.mxu0 0.0
        %685 = vmatpush1.msra.mxu0 %v526
        %686 = vmatprep.subr.mxu0 0.0
        %687 = vmatpush1.msra.mxu0 %v527
        %688 = vmatprep.subr.mxu0 0.0
        %689 = vmatpush1.msra.mxu0 %v528
        %690 = vmatprep.subr.mxu0 0.0
        %691 = vmatpush1.msra.mxu0 %v529
        %692 = vmatprep.subr.mxu0 0.0
        %693 = vmatpush1.msra.mxu0 %v530
        %694 = vmatprep.subr.mxu0 0.0
        %695 = vmatpush1.msra.mxu0 %v531
        %696 = vmatprep.subr.mxu0 0.0
        %697 = vmatpush1.msra.mxu0 %v532
        %698 = vmatprep.subr.mxu0 0.0
        %699 = vmatpush1.msra.mxu0 %v533
        %700 = vmatprep.subr.mxu0 0.0
        %701 = vmatpush1.msra.mxu0 %v534
        %702 = vmatprep.subr.mxu0 0.0
        %703 = vmatpush1.msra.mxu0 %v535
        %704 = vmatprep.subr.mxu0 0.0
        %705 = vmatpush1.msra.mxu0 %v536
        %706 = vmatprep.mubr.f32.mxu0 %v436
        %707 = vmatmul.mubr.f32.gmra.mrb[0].mxu0 %v435
        %v708 = vpop.f32.mrb[0].mxu0
        %v709 = vadd.f32 %v604, %v708
        %v710 = vpop.f32.mrb[0].mxu0
        %711 = vmatprep.mubr.f32.mxu0 %v440
        %712 = vmatmul.mubr.f32.gmra.mrb[0].mxu0 %v439
        %v713 = vpop.f32.mrb[0].mxu0
        %v714 = vadd.f32 %v609, %v713
        %v715 = vpop.f32.mrb[0].mxu0
        %716 = vmatprep.mubr.f32.mxu0 %v444
        %717 = vmatmul.mubr.f32.gmra.mrb[0].mxu0 %v443
        %v718 = vpop.f32.mrb[0].mxu0
        %v719 = vadd.f32 %v614, %v718
        %v720 = vpop.f32.mrb[0].mxu0
        %721 = vmatprep.mubr.f32.mxu0 %v448
        %722 = vmatmul.mubr.f32.gmra.mrb[0].mxu0 %v447
        %v723 = vpop.f32.mrb[0].mxu0
        %v724 = vadd.f32 %v619, %v723
        %v725 = vpop.f32.mrb[0].mxu0
        %726 = vmatprep.mubr.f32.mxu0 %v452
        %727 = vmatmul.mubr.f32.gmra.mrb[0].mxu0 %v451
        %v728 = vpop.f32.mrb[0].mxu0
        %v729 = vadd.f32 %v624, %v728
        %v730 = vpop.f32.mrb[0].mxu0
        %731 = vmatprep.mubr.f32.mxu0 %v456
        %732 = vmatmul.mubr.f32.gmra.mrb[0].mxu0 %v455
        %v733 = vpop.f32.mrb[0].mxu0
        %v734 = vadd.f32 %v629, %v733
        %v735 = vpop.f32.mrb[0].mxu0
        %736 = vmatprep.mubr.f32.mxu0 %v460
        %737 = vmatmul.mubr.f32.gmra.mrb[0].mxu0 %v459
        %v738 = vpop.f32.mrb[0].mxu0
        %v739 = vadd.f32 %v634, %v738
        %v740 = vpop.f32.mrb[0].mxu0
        %741 = vmatprep.mubr.f32.mxu0 %v464
        %742 = vmatmul.mubr.f32.gmra.mrb[0].mxu0 %v463
        %v743 = vpop.f32.mrb[0].mxu0
        %v744 = vadd.f32 %v639, %v743
        %v745 = vpop.f32.mrb[0].mxu0
        %746 = vdwg.mxu0
        %v747 = vadd.f32 %v465, %v709
        %v748 = vadd.f32 %v466, %v714
        %v749 = vadd.f32 %v467, %v719
        %v750 = vadd.f32 %v468, %v724
        %v751 = vadd.f32 %v469, %v729
        %v752 = vadd.f32 %v470, %v734
        %v753 = vadd.f32 %v471, %v739
        %v754 = vadd.f32 %v472, %v744
        %755 = vst [vmem:[#allocation2] sm:$0xff] %v747
        %756 = vst [vmem:[#allocation2 + $0x8] sm:$0xff] %v748
        %757 = vst [vmem:[#allocation2 + $0x10] sm:$0xff] %v749
        %758 = vst [vmem:[#allocation2 + $0x18] sm:$0xff] %v750
        %759 = vst [vmem:[#allocation2 + $0x20] sm:$0xff] %v751
        %760 = vst [vmem:[#allocation2 + $0x28] sm:$0xff] %v752
        %761 = vst [vmem:[#allocation2 + $0x30] sm:$0xff] %v753
        %762 = vst [vmem:[#allocation2 + $0x38] sm:$0xff] %v754
        // Predicated region
        $region65: #{tpu_custom_call.1} parent=39 // pred_check
          %p763 = pneg %p419
        $region66: #{tpu_custom_call.1} parent=39 // pred_check_branch
          %765 = sbr.rel (%p763) target = $region68
        $region67: #{tpu_custom_call.1} parent=39 // pred_region
          %v766 = vld [vmem:[#allocation3] sm:$0xff]
          %v767 = vld [vmem:[#allocation3 + $0x8] sm:$0xff]
          %v768 = vld [vmem:[#allocation3 + $0x10] sm:$0xff]
          %v769 = vld [vmem:[#allocation3 + $0x18] sm:$0xff]
          %v770 = vld [vmem:[#allocation3 + $0x20] sm:$0xff]
          %v771 = vld [vmem:[#allocation3 + $0x28] sm:$0xff]
          %v772 = vld [vmem:[#allocation3 + $0x30] sm:$0xff]
          %v773 = vld [vmem:[#allocation3 + $0x38] sm:$0xff]
          %v774 = vld [vmem:[%s404] sm:$0xff]
          %v775 = vld [vmem:[%s404 + $0x8] sm:$0xff]
          %v776 = vld [vmem:[%s404 + $0x10] sm:$0xff]
          %v777 = vld [vmem:[%s404 + $0x18] sm:$0xff]
          %v778 = vld [vmem:[%s404 + $0x20] sm:$0xff]
          %v779 = vld [vmem:[%s404 + $0x28] sm:$0xff]
          %v780 = vld [vmem:[%s404 + $0x30] sm:$0xff]
          %v781 = vld [vmem:[%s404 + $0x38] sm:$0xff]
          %v782 = vld [vmem:[%s404 + $0x40] sm:$0xff]
          %v783 = vld [vmem:[%s404 + $0x48] sm:$0xff]
          %v784 = vld [vmem:[%s404 + $0x50] sm:$0xff]
          %v785 = vld [vmem:[%s404 + $0x58] sm:$0xff]
          %v786 = vld [vmem:[%s404 + $0x60] sm:$0xff]
          %v787 = vld [vmem:[%s404 + $0x68] sm:$0xff]
          %v788 = vld [vmem:[%s404 + $0x70] sm:$0xff]
          %v789 = vld [vmem:[%s404 + $0x78] sm:$0xff]
          %v790 = vld [vmem:[%s404 + $0x80] sm:$0xff]
          %v791 = vld [vmem:[%s404 + $0x88] sm:$0xff]
          %v792 = vld [vmem:[%s404 + $0x90] sm:$0xff]
          %v793 = vld [vmem:[%s404 + $0x98] sm:$0xff]
          %v794 = vld [vmem:[%s404 + $0xa0] sm:$0xff]
          %v795 = vld [vmem:[%s404 + $0xa8] sm:$0xff]
          %v796 = vld [vmem:[%s404 + $0xb0] sm:$0xff]
          %v797 = vld [vmem:[%s404 + $0xb8] sm:$0xff]
          %v798 = vld [vmem:[%s404 + $0xc0] sm:$0xff]
          %v799 = vld [vmem:[%s404 + $0xc8] sm:$0xff]
          %v800 = vld [vmem:[%s404 + $0xd0] sm:$0xff]
          %v801 = vld [vmem:[%s404 + $0xd8] sm:$0xff]
          %v802 = vld [vmem:[%s404 + $0xe0] sm:$0xff]
          %v803 = vld [vmem:[%s404 + $0xe8] sm:$0xff]
          %v804 = vld [vmem:[%s404 + $0xf0] sm:$0xff]
          %v805 = vld [vmem:[%s404 + $0xf8] sm:$0xff]
          %v806 = vld [vmem:[%s404 + $0x100] sm:$0xff]
          %v807 = vld [vmem:[%s404 + $0x108] sm:$0xff]
          %v808 = vld [vmem:[%s404 + $0x110] sm:$0xff]
          %v809 = vld [vmem:[%s404 + $0x118] sm:$0xff]
          %v810 = vld [vmem:[%s404 + $0x120] sm:$0xff]
          %v811 = vld [vmem:[%s404 + $0x128] sm:$0xff]
          %v812 = vld [vmem:[%s404 + $0x130] sm:$0xff]
          %v813 = vld [vmem:[%s404 + $0x138] sm:$0xff]
          %v814 = vld [vmem:[%s404 + $0x140] sm:$0xff]
          %v815 = vld [vmem:[%s404 + $0x148] sm:$0xff]
          %v816 = vld [vmem:[%s404 + $0x150] sm:$0xff]
          %v817 = vld [vmem:[%s404 + $0x158] sm:$0xff]
          %v818 = vld [vmem:[%s404 + $0x160] sm:$0xff]
          %v819 = vld [vmem:[%s404 + $0x168] sm:$0xff]
          %v820 = vld [vmem:[%s404 + $0x170] sm:$0xff]
          %v821 = vld [vmem:[%s404 + $0x178] sm:$0xff]
          %v822 = vld [vmem:[%s404 + $0x180] sm:$0xff]
          %v823 = vld [vmem:[%s404 + $0x188] sm:$0xff]
          %v824 = vld [vmem:[%s404 + $0x190] sm:$0xff]
          %v825 = vld [vmem:[%s404 + $0x198] sm:$0xff]
          %v826 = vld [vmem:[%s404 + $0x1a0] sm:$0xff]
          %v827 = vld [vmem:[%s404 + $0x1a8] sm:$0xff]
          %v828 = vld [vmem:[%s404 + $0x1b0] sm:$0xff]
          %v829 = vld [vmem:[%s404 + $0x1b8] sm:$0xff]
          %v830 = vld [vmem:[%s404 + $0x1c0] sm:$0xff]
          %v831 = vld [vmem:[%s404 + $0x1c8] sm:$0xff]
          %v832 = vld [vmem:[%s404 + $0x1d0] sm:$0xff]
          %v833 = vld [vmem:[%s404 + $0x1d8] sm:$0xff]
          %v834 = vld [vmem:[%s404 + $0x1e0] sm:$0xff]
          %v835 = vld [vmem:[%s404 + $0x1e8] sm:$0xff]
          %v836 = vld [vmem:[%s404 + $0x1f0] sm:$0xff]
          %v837 = vld [vmem:[%s404 + $0x1f8] sm:$0xff]
          %838 = vmatprep.subr.mxu0 0.0
          %839 = vmatpush1.msra.mxu0 %v774
          %840 = vmatprep.subr.mxu0 0.0
          %841 = vmatpush1.msra.mxu0 %v775
          %842 = vmatprep.subr.mxu0 0.0
          %843 = vmatpush1.msra.mxu0 %v776
          %844 = vmatprep.subr.mxu0 0.0
          %845 = vmatpush1.msra.mxu0 %v777
          %846 = vmatprep.subr.mxu0 0.0
          %847 = vmatpush1.msra.mxu0 %v778
          %848 = vmatprep.subr.mxu0 0.0
          %849 = vmatpush1.msra.mxu0 %v779
          %850 = vmatprep.subr.mxu0 0.0
          %851 = vmatpush1.msra.mxu0 %v780
          %852 = vmatprep.subr.mxu0 0.0
          %853 = vmatpush1.msra.mxu0 %v781
          %854 = vmatprep.subr.mxu0 0.0
          %855 = vmatpush1.msra.mxu0 %v782
          %856 = vmatprep.subr.mxu0 0.0
          %857 = vmatpush1.msra.mxu0 %v783
          %858 = vmatprep.subr.mxu0 0.0
          %859 = vmatpush1.msra.mxu0 %v784
          %860 = vmatprep.subr.mxu0 0.0
          %861 = vmatpush1.msra.mxu0 %v785
          %862 = vmatprep.subr.mxu0 0.0
          %863 = vmatpush1.msra.mxu0 %v786
          %864 = vmatprep.subr.mxu0 0.0
          %865 = vmatpush1.msra.mxu0 %v787
          %866 = vmatprep.subr.mxu0 0.0
          %867 = vmatpush1.msra.mxu0 %v788
          %868 = vmatprep.subr.mxu0 0.0
          %869 = vmatpush1.msra.mxu0 %v789
          %870 = vmatprep.subr.mxu0 0.0
          %871 = vmatpush1.msra.mxu0 %v790
          %872 = vmatprep.subr.mxu0 0.0
          %873 = vmatpush1.msra.mxu0 %v791
          %874 = vmatprep.subr.mxu0 0.0
          %875 = vmatpush1.msra.mxu0 %v792
          %876 = vmatprep.subr.mxu0 0.0
          %877 = vmatpush1.msra.mxu0 %v793
          %878 = vmatprep.subr.mxu0 0.0
          %879 = vmatpush1.msra.mxu0 %v794
          %880 = vmatprep.subr.mxu0 0.0
          %881 = vmatpush1.msra.mxu0 %v795
          %882 = vmatprep.subr.mxu0 0.0
          %883 = vmatpush1.msra.mxu0 %v796
          %884 = vmatprep.subr.mxu0 0.0
          %885 = vmatpush1.msra.mxu0 %v797
          %886 = vmatprep.subr.mxu0 0.0
          %887 = vmatpush1.msra.mxu0 %v798
          %888 = vmatprep.subr.mxu0 0.0
          %889 = vmatpush1.msra.mxu0 %v799
          %890 = vmatprep.subr.mxu0 0.0
          %891 = vmatpush1.msra.mxu0 %v800
          %892 = vmatprep.subr.mxu0 0.0
          %893 = vmatpush1.msra.mxu0 %v801
          %894 = vmatprep.subr.mxu0 0.0
          %895 = vmatpush1.msra.mxu0 %v802
          %896 = vmatprep.subr.mxu0 0.0
          %897 = vmatpush1.msra.mxu0 %v803
          %898 = vmatprep.subr.mxu0 0.0
          %899 = vmatpush1.msra.mxu0 %v804
          %900 = vmatprep.subr.mxu0 0.0
          %901 = vmatpush1.msra.mxu0 %v805
          %902 = vmatprep.mubr.f32.mxu0 %v434
          %903 = vmatmul.mubr.f32.gmra.mrb[0].mxu0 %v433
          %v904 = vpop.f32.mrb[0].mxu0
          %v905 = vadd.f32 0.0, %v904
          %v906 = vpop.f32.mrb[0].mxu0
          %907 = vmatprep.mubr.f32.mxu0 %v438
          %908 = vmatmul.mubr.f32.gmra.mrb[0].mxu0 %v437
          %v909 = vpop.f32.mrb[0].mxu0
          %v910 = vadd.f32 0.0, %v909
          %v911 = vpop.f32.mrb[0].mxu0
          %912 = vmatprep.mubr.f32.mxu0 %v442
          %913 = vmatmul.mubr.f32.gmra.mrb[0].mxu0 %v441
          %v914 = vpop.f32.mrb[0].mxu0
          %v915 = vadd.f32 0.0, %v914
          %v916 = vpop.f32.mrb[0].mxu0
          %917 = vmatprep.mubr.f32.mxu0 %v446
          %918 = vmatmul.mubr.f32.gmra.mrb[0].mxu0 %v445
          %v919 = vpop.f32.mrb[0].mxu0
          %v920 = vadd.f32 0.0, %v919
          %v921 = vpop.f32.mrb[0].mxu0
          %922 = vmatprep.mubr.f32.mxu0 %v450
          %923 = vmatmul.mubr.f32.gmra.mrb[0].mxu0 %v449
          %v924 = vpop.f32.mrb[0].mxu0
          %v925 = vadd.f32 0.0, %v924
          %v926 = vpop.f32.mrb[0].mxu0
          %927 = vmatprep.mubr.f32.mxu0 %v454
          %928 = vmatmul.mubr.f32.gmra.mrb[0].mxu0 %v453
          %v929 = vpop.f32.mrb[0].mxu0
          %v930 = vadd.f32 0.0, %v929
          %v931 = vpop.f32.mrb[0].mxu0
          %932 = vmatprep.mubr.f32.mxu0 %v458
          %933 = vmatmul.mubr.f32.gmra.mrb[0].mxu0 %v457
          %v934 = vpop.f32.mrb[0].mxu0
          %v935 = vadd.f32 0.0, %v934
          %v936 = vpop.f32.mrb[0].mxu0
          %937 = vmatprep.mubr.f32.mxu0 %v462
          %938 = vmatmul.mubr.f32.gmra.mrb[0].mxu0 %v461
          %v939 = vpop.f32.mrb[0].mxu0
          %v940 = vadd.f32 0.0, %v939
          %v941 = vpop.f32.mrb[0].mxu0
          %942 = vdwg.mxu0
          %943 = vmatprep.subr.mxu0 0.0
          %944 = vmatpush1.msra.mxu0 %v806
          %945 = vmatprep.subr.mxu0 0.0
          %946 = vmatpush1.msra.mxu0 %v807
          %947 = vmatprep.subr.mxu0 0.0
          %948 = vmatpush1.msra.mxu0 %v808
          %949 = vmatprep.subr.mxu0 0.0
          %950 = vmatpush1.msra.mxu0 %v809
          %951 = vmatprep.subr.mxu0 0.0
          %952 = vmatpush1.msra.mxu0 %v810
          %953 = vmatprep.subr.mxu0 0.0
          %954 = vmatpush1.msra.mxu0 %v811
          %955 = vmatprep.subr.mxu0 0.0
          %956 = vmatpush1.msra.mxu0 %v812
          %957 = vmatprep.subr.mxu0 0.0
          %958 = vmatpush1.msra.mxu0 %v813
          %959 = vmatprep.subr.mxu0 0.0
          %960 = vmatpush1.msra.mxu0 %v814
          %961 = vmatprep.subr.mxu0 0.0
          %962 = vmatpush1.msra.mxu0 %v815
          %963 = vmatprep.subr.mxu0 0.0
          %964 = vmatpush1.msra.mxu0 %v816
          %965 = vmatprep.subr.mxu0 0.0
          %966 = vmatpush1.msra.mxu0 %v817
          %967 = vmatprep.subr.mxu0 0.0
          %968 = vmatpush1.msra.mxu0 %v818
          %969 = vmatprep.subr.mxu0 0.0
          %970 = vmatpush1.msra.mxu0 %v819
          %971 = vmatprep.subr.mxu0 0.0
          %972 = vmatpush1.msra.mxu0 %v820
          %973 = vmatprep.subr.mxu0 0.0
          %974 = vmatpush1.msra.mxu0 %v821
          %975 = vmatprep.subr.mxu0 0.0
          %976 = vmatpush1.msra.mxu0 %v822
          %977 = vmatprep.subr.mxu0 0.0
          %978 = vmatpush1.msra.mxu0 %v823
          %979 = vmatprep.subr.mxu0 0.0
          %980 = vmatpush1.msra.mxu0 %v824
          %981 = vmatprep.subr.mxu0 0.0
          %982 = vmatpush1.msra.mxu0 %v825
          %983 = vmatprep.subr.mxu0 0.0
          %984 = vmatpush1.msra.mxu0 %v826
          %985 = vmatprep.subr.mxu0 0.0
          %986 = vmatpush1.msra.mxu0 %v827
          %987 = vmatprep.subr.mxu0 0.0
          %988 = vmatpush1.msra.mxu0 %v828
          %989 = vmatprep.subr.mxu0 0.0
          %990 = vmatpush1.msra.mxu0 %v829
          %991 = vmatprep.subr.mxu0 0.0
          %992 = vmatpush1.msra.mxu0 %v830
          %993 = vmatprep.subr.mxu0 0.0
          %994 = vmatpush1.msra.mxu0 %v831
          %995 = vmatprep.subr.mxu0 0.0
          %996 = vmatpush1.msra.mxu0 %v832
          %997 = vmatprep.subr.mxu0 0.0
          %998 = vmatpush1.msra.mxu0 %v833
          %999 = vmatprep.subr.mxu0 0.0
          %1000 = vmatpush1.msra.mxu0 %v834
          %1001 = vmatprep.subr.mxu0 0.0
          %1002 = vmatpush1.msra.mxu0 %v835
          %1003 = vmatprep.subr.mxu0 0.0
          %1004 = vmatpush1.msra.mxu0 %v836
          %1005 = vmatprep.subr.mxu0 0.0
          %1006 = vmatpush1.msra.mxu0 %v837
          %1007 = vmatprep.mubr.f32.mxu0 %v436
          %1008 = vmatmul.mubr.f32.gmra.mrb[0].mxu0 %v435
          %v1009 = vpop.f32.mrb[0].mxu0
          %v1010 = vadd.f32 %v905, %v1009
          %v1011 = vpop.f32.mrb[0].mxu0
          %1012 = vmatprep.mubr.f32.mxu0 %v440
          %1013 = vmatmul.mubr.f32.gmra.mrb[0].mxu0 %v439
          %v1014 = vpop.f32.mrb[0].mxu0
          %v1015 = vadd.f32 %v910, %v1014
          %v1016 = vpop.f32.mrb[0].mxu0
          %1017 = vmatprep.mubr.f32.mxu0 %v444
          %1018 = vmatmul.mubr.f32.gmra.mrb[0].mxu0 %v443
          %v1019 = vpop.f32.mrb[0].mxu0
          %v1020 = vadd.f32 %v915, %v1019
          %v1021 = vpop.f32.mrb[0].mxu0
          %1022 = vmatprep.mubr.f32.mxu0 %v448
          %1023 = vmatmul.mubr.f32.gmra.mrb[0].mxu0 %v447
          %v1024 = vpop.f32.mrb[0].mxu0
          %v1025 = vadd.f32 %v920, %v1024
          %v1026 = vpop.f32.mrb[0].mxu0
          %1027 = vmatprep.mubr.f32.mxu0 %v452
          %1028 = vmatmul.mubr.f32.gmra.mrb[0].mxu0 %v451
          %v1029 = vpop.f32.mrb[0].mxu0
          %v1030 = vadd.f32 %v925, %v1029
          %v1031 = vpop.f32.mrb[0].mxu0
          %1032 = vmatprep.mubr.f32.mxu0 %v456
          %1033 = vmatmul.mubr.f32.gmra.mrb[0].mxu0 %v455
          %v1034 = vpop.f32.mrb[0].mxu0
          %v1035 = vadd.f32 %v930, %v1034
          %v1036 = vpop.f32.mrb[0].mxu0
          %1037 = vmatprep.mubr.f32.mxu0 %v460
          %1038 = vmatmul.mubr.f32.gmra.mrb[0].mxu0 %v459
          %v1039 = vpop.f32.mrb[0].mxu0
          %v1040 = vadd.f32 %v935, %v1039
          %v1041 = vpop.f32.mrb[0].mxu0
          %1042 = vmatprep.mubr.f32.mxu0 %v464
          %1043 = vmatmul.mubr.f32.gmra.mrb[0].mxu0 %v463
          %v1044 = vpop.f32.mrb[0].mxu0
          %v1045 = vadd.f32 %v940, %v1044
          %v1046 = vpop.f32.mrb[0].mxu0
          %1047 = vdwg.mxu0
          %v1048 = vadd.f32 %v766, %v1010
          %v1049 = vadd.f32 %v767, %v1015
          %v1050 = vadd.f32 %v768, %v1020
          %v1051 = vadd.f32 %v769, %v1025
          %v1052 = vadd.f32 %v770, %v1030
          %v1053 = vadd.f32 %v771, %v1035
          %v1054 = vadd.f32 %v772, %v1040
          %v1055 = vadd.f32 %v773, %v1045
          %vm1056 = vcmask 64512
          %1057 = vst.msk [vmem:[#allocation3] sm:$0xff] %vm1056, %v1048
          %1058 = vst.msk [vmem:[#allocation3 + $0x8] sm:$0xff] %vm1056, %v1049
          %1059 = vst.msk [vmem:[#allocation3 + $0x10] sm:$0xff] %vm1056, %v1050
          %1060 = vst.msk [vmem:[#allocation3 + $0x18] sm:$0xff] %vm1056, %v1051
          %1061 = vst.msk [vmem:[#allocation3 + $0x20] sm:$0xff] %vm1056, %v1052
          %1062 = vst.msk [vmem:[#allocation3 + $0x28] sm:$0xff] %vm1056, %v1053
          %1063 = vst.msk [vmem:[#allocation3 + $0x30] sm:$0xff] %vm1056, %v1054
          %1064 = vst.msk [vmem:[#allocation3 + $0x38] sm:$0xff] %vm1056, %v1055
        $region68: #{tpu_custom_call.1} parent=39 // pred_fallthru
          _
        %p1065 = scmp.eq.s32.totalorder %s35, 1
        // Predicated region
        $region69: #{tpu_custom_call.1} parent=39 // pred_check
          %p1066 = pneg %p1065
        $region70: #{tpu_custom_call.1} parent=39 // pred_check_branch
          %1068 = sbr.rel (%p1066) target = $region72
        $region71: #{tpu_custom_call.1} parent=39 // pred_region
          %v1069 = vld [vmem:[#allocation3] sm:$0xff]
          %v1070 = vld [vmem:[#allocation3 + $0x8] sm:$0xff]
          %v1071 = vld [vmem:[#allocation3 + $0x10] sm:$0xff]
          %v1072 = vld [vmem:[#allocation3 + $0x18] sm:$0xff]
          %v1073 = vld [vmem:[#allocation3 + $0x20] sm:$0xff]
          %v1074 = vld [vmem:[#allocation3 + $0x28] sm:$0xff]
          %v1075 = vld [vmem:[#allocation3 + $0x30] sm:$0xff]
          %v1076 = vld [vmem:[#allocation3 + $0x38] sm:$0xff]
          %v1077 = vld [vmem:[%s351] sm:$0xff]
          %vm1078 = vcmask 64512
          %v1080 = vsel %vm1078, %v1069, 0
          %v1083 = vsel %vm1078, %v1070, 0
          %v1086 = vsel %vm1078, %v1071, 0
          %v1089 = vsel %vm1078, %v1072, 0
          %v1092 = vsel %vm1078, %v1073, 0
          %v1095 = vsel %vm1078, %v1074, 0
          %v1098 = vsel %vm1078, %v1075, 0
          %v1101 = vsel %vm1078, %v1076, 0
          %1103 = vmatprep.subr.mxu0 0.0
          %1104 = vmatpush1.msra.mxu0 %v1077
          %1105 = vmatprep.subr.mxu0 0.0
          %1106 = vmatpush1.msra.mxu0 0.0
          %1107 = vmatprep.subr.mxu0 0.0
          %1108 = vmatpush1.msra.mxu0 0.0
          %1109 = vmatprep.subr.mxu0 0.0
          %1110 = vmatpush1.msra.mxu0 0.0
          %1111 = vmatprep.subr.mxu0 0.0
          %1112 = vmatpush1.msra.mxu0 0.0
          %1113 = vmatprep.subr.mxu0 0.0
          %1114 = vmatpush1.msra.mxu0 0.0
          %1115 = vmatprep.subr.mxu0 0.0
          %1116 = vmatpush1.msra.mxu0 0.0
          %1117 = vmatprep.subr.mxu0 0.0
          %1118 = vmatpush1.msra.mxu0 0.0
          %1119 = vmatprep.subr.mxu0 0.0
          %1120 = vmatpush1.msra.mxu0 0.0
          %1121 = vmatprep.subr.mxu0 0.0
          %1122 = vmatpush1.msra.mxu0 0.0
          %1123 = vmatprep.subr.mxu0 0.0
          %1124 = vmatpush1.msra.mxu0 0.0
          %1125 = vmatprep.subr.mxu0 0.0
          %1126 = vmatpush1.msra.mxu0 0.0
          %1127 = vmatprep.subr.mxu0 0.0
          %1128 = vmatpush1.msra.mxu0 0.0
          %1129 = vmatprep.subr.mxu0 0.0
          %1130 = vmatpush1.msra.mxu0 0.0
          %1131 = vmatprep.subr.mxu0 0.0
          %1132 = vmatpush1.msra.mxu0 0.0
          %1133 = vmatprep.subr.mxu0 0.0
          %1134 = vmatpush1.msra.mxu0 0.0
          %1135 = vmatprep.subr.mxu0 0.0
          %1136 = vmatpush1.msra.mxu0 0.0
          %1137 = vmatprep.subr.mxu0 0.0
          %1138 = vmatpush1.msra.mxu0 0.0
          %1139 = vmatprep.subr.mxu0 0.0
          %1140 = vmatpush1.msra.mxu0 0.0
          %1141 = vmatprep.subr.mxu0 0.0
          %1142 = vmatpush1.msra.mxu0 0.0
          %1143 = vmatprep.subr.mxu0 0.0
          %1144 = vmatpush1.msra.mxu0 0.0
          %1145 = vmatprep.subr.mxu0 0.0
          %1146 = vmatpush1.msra.mxu0 0.0
          %1147 = vmatprep.subr.mxu0 0.0
          %1148 = vmatpush1.msra.mxu0 0.0
          %1149 = vmatprep.subr.mxu0 0.0
          %1150 = vmatpush1.msra.mxu0 0.0
          %1151 = vmatprep.subr.mxu0 0.0
          %1152 = vmatpush1.msra.mxu0 0.0
          %1153 = vmatprep.subr.mxu0 0.0
          %1154 = vmatpush1.msra.mxu0 0.0
          %1155 = vmatprep.subr.mxu0 0.0
          %1156 = vmatpush1.msra.mxu0 0.0
          %1157 = vmatprep.subr.mxu0 0.0
          %1158 = vmatpush1.msra.mxu0 0.0
          %1159 = vmatprep.subr.mxu0 0.0
          %1160 = vmatpush1.msra.mxu0 0.0
          %1161 = vmatprep.subr.mxu0 0.0
          %1162 = vmatpush1.msra.mxu0 0.0
          %1163 = vmatprep.subr.mxu0 0.0
          %1164 = vmatpush1.msra.mxu0 0.0
          %1165 = vmatprep.subr.mxu0 0.0
          %1166 = vmatpush1.msra.mxu0 0.0
          %1167 = vmatprep.mubr.f32.mxu0 0.0
          %1168 = vmatmul.mubr.f32.gmra.mrb[0].mxu0 %v1080
          %v1169 = vpop.f32.mrb[0].mxu0
          %v1170 = vadd.f32 0.0, %v1169
          %v1171 = vpop.f32.mrb[0].mxu0
          %1172 = vmatprep.mubr.f32.mxu0 0.0
          %1173 = vmatmul.mubr.f32.gmra.mrb[0].mxu0 %v1083
          %v1174 = vpop.f32.mrb[0].mxu0
          %v1175 = vadd.f32 0.0, %v1174
          %v1176 = vpop.f32.mrb[0].mxu0
          %1177 = vmatprep.mubr.f32.mxu0 0.0
          %1178 = vmatmul.mubr.f32.gmra.mrb[0].mxu0 %v1086
          %v1179 = vpop.f32.mrb[0].mxu0
          %v1180 = vadd.f32 0.0, %v1179
          %v1181 = vpop.f32.mrb[0].mxu0
          %1182 = vmatprep.mubr.f32.mxu0 0.0
          %1183 = vmatmul.mubr.f32.gmra.mrb[0].mxu0 %v1089
          %v1184 = vpop.f32.mrb[0].mxu0
          %v1185 = vadd.f32 0.0, %v1184
          %v1186 = vpop.f32.mrb[0].mxu0
          %1187 = vmatprep.mubr.f32.mxu0 0.0
          %1188 = vmatmul.mubr.f32.gmra.mrb[0].mxu0 %v1092
          %v1189 = vpop.f32.mrb[0].mxu0
          %v1190 = vadd.f32 0.0, %v1189
          %v1191 = vpop.f32.mrb[0].mxu0
          %1192 = vmatprep.mubr.f32.mxu0 0.0
          %1193 = vmatmul.mubr.f32.gmra.mrb[0].mxu0 %v1095
          %v1194 = vpop.f32.mrb[0].mxu0
          %v1195 = vadd.f32 0.0, %v1194
          %v1196 = vpop.f32.mrb[0].mxu0
          %1197 = vmatprep.mubr.f32.mxu0 0.0
          %1198 = vmatmul.mubr.f32.gmra.mrb[0].mxu0 %v1098
          %v1199 = vpop.f32.mrb[0].mxu0
          %v1200 = vadd.f32 0.0, %v1199
          %v1201 = vpop.f32.mrb[0].mxu0
          %1202 = vmatprep.mubr.f32.mxu0 0.0
          %1203 = vmatmul.mubr.f32.gmra.mrb[0].mxu0 %v1101
          %v1204 = vpop.f32.mrb[0].mxu0
          %v1205 = vadd.f32 0.0, %v1204
          %v1206 = vpop.f32.mrb[0].mxu0
          %1207 = vdwg.mxu0
          %v1208 = vld [vmem:[#allocation2] sm:$0xff]
          %v1209 = vld [vmem:[#allocation2 + $0x8] sm:$0xff]
          %v1210 = vld [vmem:[#allocation2 + $0x10] sm:$0xff]
          %v1211 = vld [vmem:[#allocation2 + $0x18] sm:$0xff]
          %v1212 = vld [vmem:[#allocation2 + $0x20] sm:$0xff]
          %v1213 = vld [vmem:[#allocation2 + $0x28] sm:$0xff]
          %v1214 = vld [vmem:[#allocation2 + $0x30] sm:$0xff]
          %v1215 = vld [vmem:[#allocation2 + $0x38] sm:$0xff]
          %v1216 = vld [vmem:[%s342] sm:$0x1]
          %v1218 = vlaneseq
          %v1219 = vshrl.u32 %v1218, 7
          %v1220 = vsub.s32 0, %v1219
          %v1221 = vrot.slane %v1216, %v1220
          %v1223 = vadd.f32 %v1208, %v1221
          %v1224 = vadd.f32 %v1209, %v1221
          %v1225 = vadd.f32 %v1210, %v1221
          %v1226 = vadd.f32 %v1211, %v1221
          %v1227 = vadd.f32 %v1212, %v1221
          %v1228 = vadd.f32 %v1213, %v1221
          %v1229 = vadd.f32 %v1214, %v1221
          %v1230 = vadd.f32 %v1215, %v1221
          %v1231 = vadd.f32 %v1223, %v1170
          %v1232 = vadd.f32 %v1224, %v1175
          %v1233 = vadd.f32 %v1225, %v1180
          %v1234 = vadd.f32 %v1226, %v1185
          %v1235 = vadd.f32 %v1227, %v1190
          %v1236 = vadd.f32 %v1228, %v1195
          %v1237 = vadd.f32 %v1229, %v1200
          %v1238 = vadd.f32 %v1230, %v1205
          %1239 = vst [vmem:[%s396] sm:$0xff] %v1231
          %1240 = vst [vmem:[%s396 + $0x8] sm:$0xff] %v1232
          %1241 = vst [vmem:[%s396 + $0x10] sm:$0xff] %v1233
          %1242 = vst [vmem:[%s396 + $0x18] sm:$0xff] %v1234
          %1243 = vst [vmem:[%s396 + $0x20] sm:$0xff] %v1235
          %1244 = vst [vmem:[%s396 + $0x28] sm:$0xff] %v1236
          %1245 = vst [vmem:[%s396 + $0x30] sm:$0xff] %v1237
          %1246 = vst [vmem:[%s396 + $0x38] sm:$0xff] %v1238
        $region72: #{tpu_custom_call.1} parent=39 // pred_fallthru
          _
        %s1247 = sand.u32 %s191, 1
        %s1248 = scalar_lea.sflag [#allocation6], %s1247
        %s1249 = sand.u32 %s191, 1
        %s1250 = smul.addr %s1249, 64
        %s1251 = scalar_lea.vmem [#allocation12], %s1250
        // Predicated region
        $region73: #{tpu_custom_call.1} parent=39 // pred_check
          %p1252 = pneg %p201
        $region74: #{tpu_custom_call.1} parent=39 // pred_check_branch
          %1254 = sbr.rel (%p1252) target = $region76
        $region75: #{tpu_custom_call.1} parent=39 // pred_region
          %s1255 = smul.u32 8, %s33
          %s1257 = ssub.s32 1024, 1024
          %1258 = vsyncadd %s1248, %s1257
          %s1259 = smul.addr %s1255, 3
          %s1260 = sadd.s32 %s34, %s1259
          %s1261 = smul.addr %s1260, 128
          %s1262 = scalar_lea.hbm %s5, %s1261
          %s1263 = sshll.u32 %s1251, 4
          %s1264 = int_to_ptr.vmem [resolvable:$true] %s1263
          %1269 = dma.vmem_to_hbm [thread:$0]  %s1264, 1024, %s1262, %s1248, 128, 384, 8
        $region76: #{tpu_custom_call.1} parent=39 // pred_fallthru
          _
      $region40: #{tpu_custom_call.1} parent=5 // pred_fallthru
        _
      %p1270 = scmp.le.s32.totalorder 2, %s23
      // Predicated region
      $region77: #{tpu_custom_call.1} parent=5 // pred_check
        %p1271 = pneg %p1270
      $region78: #{tpu_custom_call.1} parent=5 // pred_check_branch
        %1273 = sbr.rel (%p1271) target = $region80
      $region79: #{tpu_custom_call.1} parent=5 // pred_region
        %s1274 = ssub.s32 %s23, 2
        // Predicated region
        $region81: #{tpu_custom_call.1} parent=79 // pred_check
          %p1275 = pneg %p207
        $region82: #{tpu_custom_call.1} parent=79 // pred_check_branch
          %1277 = sbr.rel (%p1275) target = $region84
        $region83: #{tpu_custom_call.1} parent=79 // pred_region
          %s1278 = sand.u32 %s192, 1
          %s1279 = scalar_lea.sflag [#allocation6], %s1278
          %s1280 = sand.u32 %s192, 1
          %s1281 = smul.addr %s1280, 64
          %s1282 = scalar_lea.vmem [#allocation12], %s1281
          %1283 = dma.done %s1279, 1024
        $region84: #{tpu_custom_call.1} parent=79 // pred_fallthru
          _
      $region80: #{tpu_custom_call.1} parent=5 // pred_fallthru
        _
    $region6: #{tpu_custom_call.1} parent=1 // loop_footer
      %s27 = sadd.s32 1, %s23
    $region7: #{tpu_custom_call.1} parent=1 // loop_footer_branch
      %22 = sbr.rel target = $region3
    $region8: #{tpu_custom_call.1} parent=1 // loop_exit
      _
    %1284 = vsyncpa [#allocation5], 1
    %s1285 = scalar_lea.sflag [#allocation5], 1
    %1286 = vsyncpa %s1285, 1
    %1287 = vsyncpa [#allocation8], 1
    %s1288 = scalar_lea.sflag [#allocation8], 1
    %1289 = vsyncpa %s1288, 1
    %1290 = vsyncpa [#allocation11], 1
    %s1291 = scalar_lea.sflag [#allocation11], 1
    %1292 = vsyncpa %s1291, 1
    %1293 = vsyncpa [#allocation6], 1
    %s1294 = scalar_lea.sflag [#allocation6], 1
    %1295 = vsyncpa %s1294, 1

</llo_original>
